<compile_context>
chip_gen: v6e
topology: v6e:2x2x1
jax: 0.10.0
libtpu: 0.0.40
codegen_flags: <defaults>
</compile_context>

<pallas_src>
import jax
import jax.numpy as jnp
from jax.experimental import pallas as pl
from jax.experimental.pallas import tpu as pltpu


# ----------------------------------------------------------------------------
# Kernel
# ----------------------------------------------------------------------------
def critic_kernel(sa_ref,
                  w14_ref, b14_ref,
                  w2_ref, b2_ref,
                  w5_ref, b5_ref,
                  w3r_ref, w6r_ref, b36_ref,
                  out_ref):
    cdt = w14_ref.dtype                     # compute dtype (f32 or bf16)
    bt = sa_ref.shape[0]
    H = w2_ref.shape[0]                     # 256 (lane-aligned head width)

    sa = sa_ref[...].astype(cdt)

    # Layer 1: single K=(state_dim+action_dim) dot, both heads fused along N.
    h = jnp.dot(sa, w14_ref[...], preferred_element_type=jnp.float32) + b14_ref[...]
    h = jnp.maximum(h, 0.0).astype(cdt)

    # Lane-aligned per-head split (256 is a multiple of the 128-lane tile).
    h1 = h[:, :H]
    h2 = h[:, H:]

    # Layer 2: un-padded per-head [256,256] dots (no block-diagonal zeros).
    g1 = jnp.maximum(
        jnp.dot(h1, w2_ref[...], preferred_element_type=jnp.float32) + b2_ref[...],
        0.0)
    g2 = jnp.maximum(
        jnp.dot(h2, w5_ref[...], preferred_element_type=jnp.float32) + b5_ref[...],
        0.0)

    # Layer 3: N=1 heads on VPU multiply + lane reduce (keeps the MXU free —
    # an MXU pass with N=1 costs the same as N=256).
    w3r = w3r_ref[...].astype(jnp.float32)          # [1, 256]
    w6r = w6r_ref[...].astype(jnp.float32)          # [1, 256]
    q1 = jnp.sum(g1 * w3r, axis=-1, keepdims=True)  # [bt, 1]
    q2 = jnp.sum(g2 * w6r, axis=-1, keepdims=True)  # [bt, 1]

    # Interleave the two heads into the fused [bt, 2] output without a narrow
    # lane concat (broadcast + select on the VPU).
    col = jax.lax.broadcasted_iota(jnp.int32, (bt, 2), dimension=1)
    q = jnp.where(col == 0, q1, q2) + b36_ref[...]
    out_ref[...] = q.astype(out_ref.dtype)


# ----------------------------------------------------------------------------
# Wrapper helpers
# ----------------------------------------------------------------------------
def _num_tensorcores():
    """Best-effort TensorCore count (2 on v7x, 1 on v5e/v6e)."""
    try:
        info = pltpu.get_tpu_info()
        for attr in ("num_cores", "core_count", "num_tensorcores", "tensorcores"):
            v = getattr(info, attr, None)
            if isinstance(v, int) and v > 0:
                return v
    except Exception:
        pass
    try:
        kind = jax.devices()[0].device_kind.lower()
        if "v7" in kind:
            return 2
    except Exception:
        pass
    return 1


def _pick_batch_tile(B, num_cores, max_tile=1024):
    """Grid policy:
      - dual-TC (v7x): even grid only when each step keeps >= 256-row tiles
        that are multiples of 256; otherwise one step.
      - single-TC (v5e/v6e): one grid step with the whole batch when it fits;
        otherwise the largest 256- (then 8-) aligned divisor."""
    if num_cores >= 2:
        upper = min(B // num_cores, max_tile)
        bt = (upper // 256) * 256
        while bt >= 256:
            if B % bt == 0 and (B // bt) % num_cores == 0:
                return bt
            bt -= 256
    if B <= max_tile:
        return B
    for step in (256, 8):
        bt = (max_tile // step) * step
        while bt >= step:
            if B % bt == 0:
                return bt
            bt -= step
    return B  # last resort: whole batch in one step


def _const_specs(shapes, single_buffer):
    """BlockSpecs for operands whose index_map is constant (weights/biases).
    Requests single-buffering when supported (no pipelining benefit for
    constants; halves their VMEM footprint)."""
    specs = []
    for shape in shapes:
        nd = len(shape)
        idx = (lambda i, _nd=nd: (0,) * _nd)
        if single_buffer:
            try:
                specs.append(pl.BlockSpec(shape, idx, pipeline_mode=pl.Buffered(1)))
                continue
            except TypeError:
                pass
        specs.append(pl.BlockSpec(shape, idx))
    return specs


def pack_critic_params(params, compute_dtype=jnp.bfloat16):
    """Pack the 6 nn.Linear layers (w stored [in, out], b [1, out]) into the
    kernel's operand set.  Weights are cast to `compute_dtype`; biases stay f32.
    Head ordering: head 1 = columns [:256] of the fused layer-1 output."""
    (w1, b1, w2, b2, w3, b3, w4, b4, w5, b5, w6, b6) = params
    f32, cd = jnp.float32, compute_dtype

    W14 = jnp.concatenate([w1, w4], axis=1).astype(cd)      # [sa_dim, 512]
    b14 = jnp.concatenate([b1, b4], axis=1).astype(f32)     # [1, 512]
    w3r = jnp.transpose(w3).astype(cd)                      # [1, 256]
    w6r = jnp.transpose(w6).astype(cd)                      # [1, 256]
    b36 = jnp.concatenate([b3, b6], axis=1).astype(f32)     # [1, 2]

    return (W14, b14,
            w2.astype(cd), b2.astype(f32),
            w5.astype(cd), b5.astype(f32),
            w3r, w6r, b36)


def critic_forward(state, action, packed, *, batch_tile=None):
    """packed = pack_critic_params(...).  Returns (q1 [B,1], q2 [B,1])."""
    W14, b14, w2, b2, w5, b5, w3r, w6r, b36 = packed
    weights = (W14, b14, w2, b2, w5, b5, w3r, w6r, b36)

    B = state.shape[0]
    sa = jnp.concatenate([state, action], axis=-1).astype(jnp.float32)
    sa_dim = sa.shape[1]
    H = w2.shape[0]                                   # 256

    num_cores = _num_tensorcores()
    bt = batch_tile if batch_tile is not None else _pick_batch_tile(B, num_cores)
    assert B % bt == 0, "batch must be divisible by the batch tile"
    grid = (B // bt,)

    # Scheduler hint (real MACs only — no block-diag zero padding).
    flops = 2 * B * (sa_dim * 2 * H + 2 * H * H + 2 * H)
    bytes_accessed = int(
        sa.size * sa.dtype.itemsize
        + sum(int(w.size) * w.dtype.itemsize for w in weights)
        + B * 2 * 4)
    cost = pl.CostEstimate(flops=flops, transcendentals=0,
                           bytes_accessed=bytes_accessed)

    # Rough scoped-VMEM need: double-buffered I/O tiles + weights + activations.
    needed = (2 * bt * sa_dim * 4 + 2 * bt * 2 * 4
              + 2 * sum(int(w.size) * w.dtype.itemsize for w in weights)
              + 6 * bt * 2 * H * 4)
    vmem_limit = int(min(max(2 * needed, 32 * 1024 * 1024), 48 * 1024 * 1024))

    wshapes = [w.shape for w in weights]

    def call(single_buffer):
        in_specs = ([pl.BlockSpec((bt, sa_dim), lambda i: (i, 0))]
                    + _const_specs(wshapes, single_buffer))
        return pl.pallas_call(
            critic_kernel,
            out_shape=jax.ShapeDtypeStruct((B, 2), jnp.float32),
            grid_spec=pltpu.PrefetchScalarGridSpec(
                num_scalar_prefetch=0,
                grid=grid,
                in_specs=in_specs,
                out_specs=pl.BlockSpec((bt, 2), lambda i: (i, 0)),
            ),
            compiler_params=pltpu.CompilerParams(
                dimension_semantics=("parallel",),
                vmem_limit_bytes=vmem_limit),
            cost_estimate=cost,
        )(sa, *weights)

    try:
        out = call(single_buffer=True)
    except Exception:
        # Fall back to default (double-buffered) constant specs if the
        # single-buffer request is rejected by this JAX/Mosaic version.
        out = call(single_buffer=False)

    return out[:, 0:1], out[:, 1:2]


# ----------------------------------------------------------------------------
# Init + pure-JAX reference (matches the PyTorch module semantics)
# ----------------------------------------------------------------------------
def init_params(key, state_dim, action_dim, hidden=256):
    """nn.Linear-style init; weights stored transposed ([in, out]), biases [1, out]."""
    sa_dim = state_dim + action_dim
    dims = [(sa_dim, hidden), (hidden, hidden), (hidden, 1),
            (sa_dim, hidden), (hidden, hidden), (hidden, 1)]
    params = []
    for (din, dout) in dims:
        key, kw, kb = jax.random.split(key, 3)
        bound = 1.0 / jnp.sqrt(din)
        w = jax.random.uniform(kw, (din, dout), jnp.float32, -bound, bound)
        b = jax.random.uniform(kb, (1, dout), jnp.float32, -bound, bound)
        params += [w, b]
    return tuple(params)


def critic_reference(state, action, params):
    (w1, b1, w2, b2, w3, b3, w4, b4, w5, b5, w6, b6) = params
    sa = jnp.concatenate([state, action], axis=-1)
    h = jnp.maximum(sa @ w1 + b1, 0.0)
    h = jnp.maximum(h @ w2 + b2, 0.0)
    q1 = h @ w3 + b3
    g = jnp.maximum(sa @ w4 + b4, 0.0)
    g = jnp.maximum(g @ w5 + b5, 0.0)
    q2 = g @ w6 + b6
    return q1, q2


# ----------------------------------------------------------------------------
# Demo / validation
# ----------------------------------------------------------------------------
if __name__ == "__main__":
    key = jax.random.PRNGKey(0)
    B, state_dim, action_dim = 64, 12, 4

    k1, k2, k3 = jax.random.split(key, 3)
    state = jax.random.normal(k1, (B, state_dim), jnp.float32)
    action = jax.random.normal(k2, (B, action_dim), jnp.float32)
    params = init_params(k3, state_dim, action_dim)

    r1, r2 = critic_reference(state, action, params)

    # --- f32 compute path --------------------------------------------------
    packed_f32 = pack_critic_params(params, jnp.float32)
    q1, q2 = critic_forward(state, action, packed_f32)
    jax.block_until_ready((q1, q2))
    assert q1.shape == (B, 1) and q2.shape == (B, 1)
    assert jnp.allclose(q1, r1, atol=2e-2, rtol=2e-2)
    assert jnp.allclose(q2, r2, atol=2e-2, rtol=2e-2)

    # --- bf16 weights/activations, f32 accumulation (MXU-native fast path) --
    packed_bf16 = pack_critic_params(params, jnp.bfloat16)
    q1b, q2b = critic_forward(state, action, packed_bf16)
    jax.block_until_ready((q1b, q2b))
    assert jnp.allclose(q1b, r1, atol=5e-2, rtol=5e-2)
    assert jnp.allclose(q2b, r2, atol=5e-2, rtol=5e-2)

    print("KERNEL_OK")
</pallas_src>

<mosaic_0001>
module attributes {stable_mosaic.version = 11 : i64} {
  func.func @critic_kernel(%arg0: i32, %arg1: memref<64x16xf32, #tpu.memory_space<vmem>>, %arg2: memref<16x512xf32, #tpu.memory_space<vmem>>, %arg3: memref<1x512xf32, #tpu.memory_space<vmem>>, %arg4: memref<256x256xf32, #tpu.memory_space<vmem>>, %arg5: memref<1x256xf32, #tpu.memory_space<vmem>>, %arg6: memref<256x256xf32, #tpu.memory_space<vmem>>, %arg7: memref<1x256xf32, #tpu.memory_space<vmem>>, %arg8: memref<1x256xf32, #tpu.memory_space<vmem>>, %arg9: memref<1x256xf32, #tpu.memory_space<vmem>>, %arg10: memref<1x2xf32, #tpu.memory_space<vmem>>, %arg11: memref<64x2xf32, #tpu.memory_space<vmem>>) attributes {dimension_semantics = [#tpu.dimension_semantics<parallel>], iteration_bounds = array<i64: 1>, scalar_prefetch = 0 : i64, scratch_operands = 0 : i64, tpu.core_type = #tpu.core_type<tc>, window_params = [{transform_indices = @transform_0, window_bounds = array<i64: 64, 16>}, {pipeline_mode = #tpu.pipeline_mode<synchronous>, transform_indices = @transform_1, window_bounds = array<i64: 16, 512>}, {pipeline_mode = #tpu.pipeline_mode<synchronous>, transform_indices = @transform_2, window_bounds = array<i64: 1, 512>}, {pipeline_mode = #tpu.pipeline_mode<synchronous>, transform_indices = @transform_3, window_bounds = array<i64: 256, 256>}, {pipeline_mode = #tpu.pipeline_mode<synchronous>, transform_indices = @transform_4, window_bounds = array<i64: 1, 256>}, {pipeline_mode = #tpu.pipeline_mode<synchronous>, transform_indices = @transform_5, window_bounds = array<i64: 256, 256>}, {pipeline_mode = #tpu.pipeline_mode<synchronous>, transform_indices = @transform_6, window_bounds = array<i64: 1, 256>}, {pipeline_mode = #tpu.pipeline_mode<synchronous>, transform_indices = @transform_7, window_bounds = array<i64: 1, 256>}, {pipeline_mode = #tpu.pipeline_mode<synchronous>, transform_indices = @transform_8, window_bounds = array<i64: 1, 256>}, {pipeline_mode = #tpu.pipeline_mode<synchronous>, transform_indices = @transform_9, window_bounds = array<i64: 1, 2>}, {transform_indices = @transform_10, window_bounds = array<i64: 64, 2>}]} {
    %c0 = arith.constant 0 : index
    %c0_0 = arith.constant 0 : index
    %0 = vector.load %arg1[%c0, %c0_0] : memref<64x16xf32, #tpu.memory_space<vmem>>, vector<64x16xf32>
    %c0_1 = arith.constant 0 : index
    %c0_2 = arith.constant 0 : index
    %1 = vector.load %arg2[%c0_1, %c0_2] : memref<16x512xf32, #tpu.memory_space<vmem>>, vector<16x512xf32>
    %cst = arith.constant dense<0.000000e+00> : vector<64x512xf32>
    %2 = tpu.matmul %0, %1, %cst {dimension_numbers = #tpu.dot_dimension_numbers<[1], [0], [0], [1], [0, 0, 1, 1], [], []>} : vector<64x16xf32>, vector<16x512xf32>, vector<64x512xf32> -> vector<64x512xf32>
    %c0_3 = arith.constant 0 : index
    %c0_4 = arith.constant 0 : index
    %3 = vector.load %arg3[%c0_3, %c0_4] : memref<1x512xf32, #tpu.memory_space<vmem>>, vector<1x512xf32>
    %4 = vector.broadcast %3 : vector<1x512xf32> to vector<64x512xf32>
    %5 = arith.addf %2, %4 : vector<64x512xf32>
    %cst_5 = arith.constant 0.000000e+00 : f32
    %6 = vector.broadcast %cst_5 : f32 to vector<64x512xf32>
    %7 = arith.maximumf %5, %6 : vector<64x512xf32>
    %8 = vector.extract_strided_slice %7 {offsets = [0, 0], sizes = [64, 256], strides = [1, 1]} : vector<64x512xf32> to vector<64x256xf32>
    %9 = vector.extract_strided_slice %7 {offsets = [0, 256], sizes = [64, 256], strides = [1, 1]} : vector<64x512xf32> to vector<64x256xf32>
    %c0_6 = arith.constant 0 : index
    %c0_7 = arith.constant 0 : index
    %10 = vector.load %arg4[%c0_6, %c0_7] : memref<256x256xf32, #tpu.memory_space<vmem>>, vector<256x256xf32>
    %cst_8 = arith.constant dense<0.000000e+00> : vector<64x256xf32>
    %11 = tpu.matmul %8, %10, %cst_8 {dimension_numbers = #tpu.dot_dimension_numbers<[1], [0], [0], [1], [0, 0, 1, 1], [], []>} : vector<64x256xf32>, vector<256x256xf32>, vector<64x256xf32> -> vector<64x256xf32>
    %c0_9 = arith.constant 0 : index
    %c0_10 = arith.constant 0 : index
    %12 = vector.load %arg5[%c0_9, %c0_10] : memref<1x256xf32, #tpu.memory_space<vmem>>, vector<1x256xf32>
    %13 = vector.broadcast %12 : vector<1x256xf32> to vector<64x256xf32>
    %14 = arith.addf %11, %13 : vector<64x256xf32>
    %cst_11 = arith.constant 0.000000e+00 : f32
    %15 = vector.broadcast %cst_11 : f32 to vector<64x256xf32>
    %16 = arith.maximumf %14, %15 : vector<64x256xf32>
    %c0_12 = arith.constant 0 : index
    %c0_13 = arith.constant 0 : index
    %17 = vector.load %arg6[%c0_12, %c0_13] : memref<256x256xf32, #tpu.memory_space<vmem>>, vector<256x256xf32>
    %cst_14 = arith.constant dense<0.000000e+00> : vector<64x256xf32>
    %18 = tpu.matmul %9, %17, %cst_14 {dimension_numbers = #tpu.dot_dimension_numbers<[1], [0], [0], [1], [0, 0, 1, 1], [], []>} : vector<64x256xf32>, vector<256x256xf32>, vector<64x256xf32> -> vector<64x256xf32>
    %c0_15 = arith.constant 0 : index
    %c0_16 = arith.constant 0 : index
    %19 = vector.load %arg7[%c0_15, %c0_16] : memref<1x256xf32, #tpu.memory_space<vmem>>, vector<1x256xf32>
    %20 = vector.broadcast %19 : vector<1x256xf32> to vector<64x256xf32>
    %21 = arith.addf %18, %20 : vector<64x256xf32>
    %cst_17 = arith.constant 0.000000e+00 : f32
    %22 = vector.broadcast %cst_17 : f32 to vector<64x256xf32>
    %23 = arith.maximumf %21, %22 : vector<64x256xf32>
    %c0_18 = arith.constant 0 : index
    %c0_19 = arith.constant 0 : index
    %24 = vector.load %arg8[%c0_18, %c0_19] : memref<1x256xf32, #tpu.memory_space<vmem>>, vector<1x256xf32>
    %c0_20 = arith.constant 0 : index
    %c0_21 = arith.constant 0 : index
    %25 = vector.load %arg9[%c0_20, %c0_21] : memref<1x256xf32, #tpu.memory_space<vmem>>, vector<1x256xf32>
    %26 = vector.broadcast %24 : vector<1x256xf32> to vector<64x256xf32>
    %27 = arith.mulf %16, %26 : vector<64x256xf32>
    %cst_22 = arith.constant dense<0.000000e+00> : vector<64xf32>
    %28 = vector.multi_reduction <add>, %27, %cst_22 [1] : vector<64x256xf32> to vector<64xf32>
    %29 = vector.shape_cast %28 : vector<64xf32> to vector<64x1xf32>
    %30 = vector.broadcast %25 : vector<1x256xf32> to vector<64x256xf32>
    %31 = arith.mulf %23, %30 : vector<64x256xf32>
    %cst_23 = arith.constant dense<0.000000e+00> : vector<64xf32>
    %32 = vector.multi_reduction <add>, %31, %cst_23 [1] : vector<64x256xf32> to vector<64xf32>
    %33 = vector.shape_cast %32 : vector<64xf32> to vector<64x1xf32>
    %34 = tpu.iota {dimensions = array<i32: 1>} : vector<64x2xi32>
    %c0_i32 = arith.constant 0 : i32
    %35 = vector.broadcast %c0_i32 : i32 to vector<64x2xi32>
    %36 = arith.cmpi eq, %34, %35 : vector<64x2xi32>
    %37 = vector.shape_cast %29 : vector<64x1xf32> to vector<64x1xf32>
    %38 = vector.broadcast %37 : vector<64x1xf32> to vector<64x2xf32>
    %39 = vector.shape_cast %33 : vector<64x1xf32> to vector<64x1xf32>
    %40 = vector.broadcast %39 : vector<64x1xf32> to vector<64x2xf32>
    %41 = arith.select %36, %38, %40 : vector<64x2xi1>, vector<64x2xf32>
    %c0_24 = arith.constant 0 : index
    %c0_25 = arith.constant 0 : index
    %42 = vector.load %arg10[%c0_24, %c0_25] : memref<1x2xf32, #tpu.memory_space<vmem>>, vector<1x2xf32>
    %43 = vector.broadcast %42 : vector<1x2xf32> to vector<64x2xf32>
    %44 = arith.addf %41, %43 : vector<64x2xf32>
    %c0_26 = arith.constant 0 : index
    %c0_27 = arith.constant 0 : index
    %45 = vector.load %arg11[%c0_26, %c0_27] : memref<64x2xf32, #tpu.memory_space<vmem>>, vector<64x2xf32>
    tpu.vector_store %arg11[%c0_26, %c0_27], %44 {strides = array<i32>} : memref<64x2xf32, #tpu.memory_space<vmem>>, vector<64x2xf32>,
    return
  }
  func.func @transform_0(%arg0: i32) -> (i32, i32) {
    %c0_i32 = arith.constant 0 : i32
    %c0_i32_0 = arith.constant 0 : i32
    return %arg0, %c0_i32 : i32, i32
  }
  func.func @transform_1(%arg0: i32) -> (i32, i32) {
    %c0_i32 = arith.constant 0 : i32
    %c0_i32_0 = arith.constant 0 : i32
    %c0_i32_1 = arith.constant 0 : i32
    return %c0_i32, %c0_i32_0 : i32, i32
  }
  func.func @transform_2(%arg0: i32) -> (i32, i32) {
    %c0_i32 = arith.constant 0 : i32
    %c0_i32_0 = arith.constant 0 : i32
    %c0_i32_1 = arith.constant 0 : i32
    return %c0_i32, %c0_i32_0 : i32, i32
  }
  func.func @transform_3(%arg0: i32) -> (i32, i32) {
    %c0_i32 = arith.constant 0 : i32
    %c0_i32_0 = arith.constant 0 : i32
    %c0_i32_1 = arith.constant 0 : i32
    return %c0_i32, %c0_i32_0 : i32, i32
  }
  func.func @transform_4(%arg0: i32) -> (i32, i32) {
    %c0_i32 = arith.constant 0 : i32
    %c0_i32_0 = arith.constant 0 : i32
    %c0_i32_1 = arith.constant 0 : i32
    return %c0_i32, %c0_i32_0 : i32, i32
  }
  func.func @transform_5(%arg0: i32) -> (i32, i32) {
    %c0_i32 = arith.constant 0 : i32
    %c0_i32_0 = arith.constant 0 : i32
    %c0_i32_1 = arith.constant 0 : i32
    return %c0_i32, %c0_i32_0 : i32, i32
  }
  func.func @transform_6(%arg0: i32) -> (i32, i32) {
    %c0_i32 = arith.constant 0 : i32
    %c0_i32_0 = arith.constant 0 : i32
    %c0_i32_1 = arith.constant 0 : i32
    return %c0_i32, %c0_i32_0 : i32, i32
  }
  func.func @transform_7(%arg0: i32) -> (i32, i32) {
    %c0_i32 = arith.constant 0 : i32
    %c0_i32_0 = arith.constant 0 : i32
    %c0_i32_1 = arith.constant 0 : i32
    return %c0_i32, %c0_i32_0 : i32, i32
  }
  func.func @transform_8(%arg0: i32) -> (i32, i32) {
    %c0_i32 = arith.constant 0 : i32
    %c0_i32_0 = arith.constant 0 : i32
    %c0_i32_1 = arith.constant 0 : i32
    return %c0_i32, %c0_i32_0 : i32, i32
  }
  func.func @transform_9(%arg0: i32) -> (i32, i32) {
    %c0_i32 = arith.constant 0 : i32
    %c0_i32_0 = arith.constant 0 : i32
    %c0_i32_1 = arith.constant 0 : i32
    return %c0_i32, %c0_i32_0 : i32, i32
  }
  func.func @transform_10(%arg0: i32) -> (i32, i32) {
    %c0_i32 = arith.constant 0 : i32
    %c0_i32_0 = arith.constant 0 : i32
    return %arg0, %c0_i32 : i32, i32
  }
}

module attributes {stable_mosaic.version = 11 : i64} {
  func.func @critic_kernel(%arg0: i32, %arg1: memref<64x16xf32, #tpu.memory_space<vmem>>, %arg2: memref<16x512xf32, #tpu.memory_space<vmem>>, %arg3: memref<1x512xf32, #tpu.memory_space<vmem>>, %arg4: memref<256x256xf32, #tpu.memory_space<vmem>>, %arg5: memref<1x256xf32, #tpu.memory_space<vmem>>, %arg6: memref<256x256xf32, #tpu.memory_space<vmem>>, %arg7: memref<1x256xf32, #tpu.memory_space<vmem>>, %arg8: memref<1x256xf32, #tpu.memory_space<vmem>>, %arg9: memref<1x256xf32, #tpu.memory_space<vmem>>, %arg10: memref<1x2xf32, #tpu.memory_space<vmem>>, %arg11: memref<64x2xf32, #tpu.memory_space<vmem>>) attributes {dimension_semantics = [#tpu.dimension_semantics<parallel>], iteration_bounds = array<i64: 1>, scalar_prefetch = 0 : i64, scratch_operands = 0 : i64, tpu.core_type = #tpu.core_type<tc>, window_params = [{transform_indices = @transform_0, window_bounds = array<i64: 64, 16>}, {pipeline_mode = #tpu.pipeline_mode<synchronous>, transform_indices = @transform_1, window_bounds = array<i64: 16, 512>}, {pipeline_mode = #tpu.pipeline_mode<synchronous>, transform_indices = @transform_2, window_bounds = array<i64: 1, 512>}, {pipeline_mode = #tpu.pipeline_mode<synchronous>, transform_indices = @transform_3, window_bounds = array<i64: 256, 256>}, {pipeline_mode = #tpu.pipeline_mode<synchronous>, transform_indices = @transform_4, window_bounds = array<i64: 1, 256>}, {pipeline_mode = #tpu.pipeline_mode<synchronous>, transform_indices = @transform_5, window_bounds = array<i64: 256, 256>}, {pipeline_mode = #tpu.pipeline_mode<synchronous>, transform_indices = @transform_6, window_bounds = array<i64: 1, 256>}, {pipeline_mode = #tpu.pipeline_mode<synchronous>, transform_indices = @transform_7, window_bounds = array<i64: 1, 256>}, {pipeline_mode = #tpu.pipeline_mode<synchronous>, transform_indices = @transform_8, window_bounds = array<i64: 1, 256>}, {pipeline_mode = #tpu.pipeline_mode<synchronous>, transform_indices = @transform_9, window_bounds = array<i64: 1, 2>}, {transform_indices = @transform_10, window_bounds = array<i64: 64, 2>}]} {
    %c0 = arith.constant 0 : index
    %c0_0 = arith.constant 0 : index
    %0 = vector.load %arg1[%c0, %c0_0] : memref<64x16xf32, #tpu.memory_space<vmem>>, vector<64x16xf32>
    %c0_1 = arith.constant 0 : index
    %c0_2 = arith.constant 0 : index
    %1 = vector.load %arg2[%c0_1, %c0_2] : memref<16x512xf32, #tpu.memory_space<vmem>>, vector<16x512xf32>
    %cst = arith.constant dense<0.000000e+00> : vector<64x512xf32>
    %2 = tpu.matmul %0, %1, %cst {dimension_numbers = #tpu.dot_dimension_numbers<[1], [0], [0], [1], [0, 0, 1, 1], [], []>} : vector<64x16xf32>, vector<16x512xf32>, vector<64x512xf32> -> vector<64x512xf32>
    %c0_3 = arith.constant 0 : index
    %c0_4 = arith.constant 0 : index
    %3 = vector.load %arg3[%c0_3, %c0_4] : memref<1x512xf32, #tpu.memory_space<vmem>>, vector<1x512xf32>
    %4 = vector.broadcast %3 : vector<1x512xf32> to vector<64x512xf32>
    %5 = arith.addf %2, %4 : vector<64x512xf32>
    %cst_5 = arith.constant 0.000000e+00 : f32
    %6 = vector.broadcast %cst_5 : f32 to vector<64x512xf32>
    %7 = arith.maximumf %5, %6 : vector<64x512xf32>
    %8 = vector.extract_strided_slice %7 {offsets = [0, 0], sizes = [64, 256], strides = [1, 1]} : vector<64x512xf32> to vector<64x256xf32>
    %9 = vector.extract_strided_slice %7 {offsets = [0, 256], sizes = [64, 256], strides = [1, 1]} : vector<64x512xf32> to vector<64x256xf32>
    %c0_6 = arith.constant 0 : index
    %c0_7 = arith.constant 0 : index
    %10 = vector.load %arg4[%c0_6, %c0_7] : memref<256x256xf32, #tpu.memory_space<vmem>>, vector<256x256xf32>
    %cst_8 = arith.constant dense<0.000000e+00> : vector<64x256xf32>
    %11 = tpu.matmul %8, %10, %cst_8 {dimension_numbers = #tpu.dot_dimension_numbers<[1], [0], [0], [1], [0, 0, 1, 1], [], []>} : vector<64x256xf32>, vector<256x256xf32>, vector<64x256xf32> -> vector<64x256xf32>
    %c0_9 = arith.constant 0 : index
    %c0_10 = arith.constant 0 : index
    %12 = vector.load %arg5[%c0_9, %c0_10] : memref<1x256xf32, #tpu.memory_space<vmem>>, vector<1x256xf32>
    %13 = vector.broadcast %12 : vector<1x256xf32> to vector<64x256xf32>
    %14 = arith.addf %11, %13 : vector<64x256xf32>
    %cst_11 = arith.constant 0.000000e+00 : f32
    %15 = vector.broadcast %cst_11 : f32 to vector<64x256xf32>
    %16 = arith.maximumf %14, %15 : vector<64x256xf32>
    %c0_12 = arith.constant 0 : index
    %c0_13 = arith.constant 0 : index
    %17 = vector.load %arg6[%c0_12, %c0_13] : memref<256x256xf32, #tpu.memory_space<vmem>>, vector<256x256xf32>
    %cst_14 = arith.constant dense<0.000000e+00> : vector<64x256xf32>
    %18 = tpu.matmul %9, %17, %cst_14 {dimension_numbers = #tpu.dot_dimension_numbers<[1], [0], [0], [1], [0, 0, 1, 1], [], []>} : vector<64x256xf32>, vector<256x256xf32>, vector<64x256xf32> -> vector<64x256xf32>
    %c0_15 = arith.constant 0 : index
    %c0_16 = arith.constant 0 : index
    %19 = vector.load %arg7[%c0_15, %c0_16] : memref<1x256xf32, #tpu.memory_space<vmem>>, vector<1x256xf32>
    %20 = vector.broadcast %19 : vector<1x256xf32> to vector<64x256xf32>
    %21 = arith.addf %18, %20 : vector<64x256xf32>
    %cst_17 = arith.constant 0.000000e+00 : f32
    %22 = vector.broadcast %cst_17 : f32 to vector<64x256xf32>
    %23 = arith.maximumf %21, %22 : vector<64x256xf32>
    %c0_18 = arith.constant 0 : index
    %c0_19 = arith.constant 0 : index
    %24 = vector.load %arg8[%c0_18, %c0_19] : memref<1x256xf32, #tpu.memory_space<vmem>>, vector<1x256xf32>
    %c0_20 = arith.constant 0 : index
    %c0_21 = arith.constant 0 : index
    %25 = vector.load %arg9[%c0_20, %c0_21] : memref<1x256xf32, #tpu.memory_space<vmem>>, vector<1x256xf32>
    %26 = vector.broadcast %24 : vector<1x256xf32> to vector<64x256xf32>
    %27 = arith.mulf %16, %26 : vector<64x256xf32>
    %cst_22 = arith.constant dense<0.000000e+00> : vector<64xf32>
    %28 = vector.multi_reduction <add>, %27, %cst_22 [1] : vector<64x256xf32> to vector<64xf32>
    %29 = vector.shape_cast %28 : vector<64xf32> to vector<64x1xf32>
    %30 = vector.broadcast %25 : vector<1x256xf32> to vector<64x256xf32>
    %31 = arith.mulf %23, %30 : vector<64x256xf32>
    %cst_23 = arith.constant dense<0.000000e+00> : vector<64xf32>
    %32 = vector.multi_reduction <add>, %31, %cst_23 [1] : vector<64x256xf32> to vector<64xf32>
    %33 = vector.shape_cast %32 : vector<64xf32> to vector<64x1xf32>
    %34 = tpu.iota {dimensions = array<i32: 1>} : vector<64x2xi32>
    %c0_i32 = arith.constant 0 : i32
    %35 = vector.broadcast %c0_i32 : i32 to vector<64x2xi32>
    %36 = arith.cmpi eq, %34, %35 : vector<64x2xi32>
    %37 = vector.shape_cast %29 : vector<64x1xf32> to vector<64x1xf32>
    %38 = vector.broadcast %37 : vector<64x1xf32> to vector<64x2xf32>
    %39 = vector.shape_cast %33 : vector<64x1xf32> to vector<64x1xf32>
    %40 = vector.broadcast %39 : vector<64x1xf32> to vector<64x2xf32>
    %41 = arith.select %36, %38, %40 : vector<64x2xi1>, vector<64x2xf32>
    %c0_24 = arith.constant 0 : index
    %c0_25 = arith.constant 0 : index
    %42 = vector.load %arg10[%c0_24, %c0_25] : memref<1x2xf32, #tpu.memory_space<vmem>>, vector<1x2xf32>
    %43 = vector.broadcast %42 : vector<1x2xf32> to vector<64x2xf32>
    %44 = arith.addf %41, %43 : vector<64x2xf32>
    %c0_26 = arith.constant 0 : index
    %c0_27 = arith.constant 0 : index
    %45 = vector.load %arg11[%c0_26, %c0_27] : memref<64x2xf32, #tpu.memory_space<vmem>>, vector<64x2xf32>
    tpu.vector_store %arg11[%c0_26, %c0_27], %44 {strides = array<i32>} : memref<64x2xf32, #tpu.memory_space<vmem>>, vector<64x2xf32>,
    return
  }
  func.func @transform_0(%arg0: i32) -> (i32, i32) {
    %c0_i32 = arith.constant 0 : i32
    %c0_i32_0 = arith.constant 0 : i32
    return %arg0, %c0_i32 : i32, i32
  }
  func.func @transform_1(%arg0: i32) -> (i32, i32) {
    %c0_i32 = arith.constant 0 : i32
    %c0_i32_0 = arith.constant 0 : i32
    %c0_i32_1 = arith.constant 0 : i32
    return %c0_i32, %c0_i32_0 : i32, i32
  }
  func.func @transform_2(%arg0: i32) -> (i32, i32) {
    %c0_i32 = arith.constant 0 : i32
    %c0_i32_0 = arith.constant 0 : i32
    %c0_i32_1 = arith.constant 0 : i32
    return %c0_i32, %c0_i32_0 : i32, i32
  }
  func.func @transform_3(%arg0: i32) -> (i32, i32) {
    %c0_i32 = arith.constant 0 : i32
    %c0_i32_0 = arith.constant 0 : i32
    %c0_i32_1 = arith.constant 0 : i32
    return %c0_i32, %c0_i32_0 : i32, i32
  }
  func.func @transform_4(%arg0: i32) -> (i32, i32) {
    %c0_i32 = arith.constant 0 : i32
    %c0_i32_0 = arith.constant 0 : i32
    %c0_i32_1 = arith.constant 0 : i32
    return %c0_i32, %c0_i32_0 : i32, i32
  }
  func.func @transform_5(%arg0: i32) -> (i32, i32) {
    %c0_i32 = arith.constant 0 : i32
    %c0_i32_0 = arith.constant 0 : i32
    %c0_i32_1 = arith.constant 0 : i32
    return %c0_i32, %c0_i32_0 : i32, i32
  }
  func.func @transform_6(%arg0: i32) -> (i32, i32) {
    %c0_i32 = arith.constant 0 : i32
    %c0_i32_0 = arith.constant 0 : i32
    %c0_i32_1 = arith.constant 0 : i32
    return %c0_i32, %c0_i32_0 : i32, i32
  }
  func.func @transform_7(%arg0: i32) -> (i32, i32) {
    %c0_i32 = arith.constant 0 : i32
    %c0_i32_0 = arith.constant 0 : i32
    %c0_i32_1 = arith.constant 0 : i32
    return %c0_i32, %c0_i32_0 : i32, i32
  }
  func.func @transform_8(%arg0: i32) -> (i32, i32) {
    %c0_i32 = arith.constant 0 : i32
    %c0_i32_0 = arith.constant 0 : i32
    %c0_i32_1 = arith.constant 0 : i32
    return %c0_i32, %c0_i32_0 : i32, i32
  }
  func.func @transform_9(%arg0: i32) -> (i32, i32) {
    %c0_i32 = arith.constant 0 : i32
    %c0_i32_0 = arith.constant 0 : i32
    %c0_i32_1 = arith.constant 0 : i32
    return %c0_i32, %c0_i32_0 : i32, i32
  }
  func.func @transform_10(%arg0: i32) -> (i32, i32) {
    %c0_i32 = arith.constant 0 : i32
    %c0_i32_0 = arith.constant 0 : i32
    return %arg0, %c0_i32 : i32, i32
  }
}

</mosaic_0001>

<llo_original>
// kernel: tpu_custom_call.1
$region0: #{tpu_custom_call.1}
  #allocation0 [shape = 'u32[]', space=smem, size = 0x4, offset = 0x4, fixed_abs, tag = 'smem constant byte address 0x4 - core index']
  #allocation1 [shape = 'u32[144,128]{1,0:T(1,128)}', space=vmem, size = 0x12000, scoped, tag = 'internal scratch']
  %s0 = inlined_call_operand.vmem [shape: f32[64,16], index: 0, kind: input, shape index: {}]
  %s1 = inlined_call_operand.vmem [shape: f32[16,512], index: 1, kind: input, shape index: {}]
  %s2 = inlined_call_operand.vmem [shape: f32[1,512], index: 2, kind: input, shape index: {}]
  %s3 = inlined_call_operand.hbm [shape: f32[256,256], index: 3, kind: input, shape index: {}]
  %s4 = inlined_call_operand.vmem [shape: f32[1,256], index: 4, kind: input, shape index: {}]
  %s5 = inlined_call_operand.hbm [shape: f32[256,256], index: 5, kind: input, shape index: {}]
  %s6 = inlined_call_operand.vmem [shape: f32[1,256], index: 6, kind: input, shape index: {}]
  %s7 = inlined_call_operand.vmem [shape: f32[1,256], index: 7, kind: input, shape index: {}]
  %s8 = inlined_call_operand.vmem [shape: f32[1,256], index: 8, kind: input, shape index: {}]
  %s9 = inlined_call_operand.vmem [shape: f32[1,2], index: 9, kind: input, shape index: {}]
  %s10 = inlined_call_operand.vmem [shape: f32[64,2], index: 10, kind: output, shape index: {}]
  %s11 = sld [smem:[#allocation0]]
  $region58: #{tpu_custom_call.1} parent=0
    _
  %s13 = ssub.s32 1, %s11
  %s14 = scalar_select 0, %s13, %s11
  $region1: #{tpu_custom_call.1} parent=0
    #allocation2 [shape = 'u8[262144]{0}', space=vmem, size = 0x40000, scoped, tag = 'input window, operand 3, single buffered']
    #allocation3 [shape = 's32[1]{0}', space=sflag, size = 0x4, scoped, tag = 'scoped memory for tpu_custom_call.1']
    #allocation4 [shape = 'u8[262144]{0}', space=vmem, size = 0x40000, scoped, tag = 'input window, operand 5, single buffered']
    #allocation5 [shape = 's32[1]{0}', space=sflag, size = 0x4, scoped, tag = 'scoped memory for tpu_custom_call.1']
    %15 = vsyncpa [#allocation3], 0
    %16 = vsyncpa [#allocation5], 0
    // Predicated region
    $region2: #{tpu_custom_call.1} parent=1 // pred_check
      _
    $region3: #{tpu_custom_call.1} parent=1 // pred_check_branch
      %18 = sbr.rel (0) target = $region5
    $region4: #{tpu_custom_call.1} parent=1 // pred_region
      _
    $region5: #{tpu_custom_call.1} parent=1 // pred_fallthru
      _
    // Predicated region
    $region6: #{tpu_custom_call.1} parent=1 // pred_check
      _
    $region7: #{tpu_custom_call.1} parent=1 // pred_check_branch
      %20 = sbr.rel (0) target = $region9
    $region8: #{tpu_custom_call.1} parent=1 // pred_region
      _
    $region9: #{tpu_custom_call.1} parent=1 // pred_fallthru
      _
    // Predicated region
    $region10: #{tpu_custom_call.1} parent=1 // pred_check
      _
    $region11: #{tpu_custom_call.1} parent=1 // pred_check_branch
      %22 = sbr.rel (0) target = $region13
    $region12: #{tpu_custom_call.1} parent=1 // pred_region
      _
    $region13: #{tpu_custom_call.1} parent=1 // pred_fallthru
      _
    // Predicated region
    $region14: #{tpu_custom_call.1} parent=1 // pred_check
      _
    $region15: #{tpu_custom_call.1} parent=1 // pred_check_branch
      %24 = sbr.rel (0) target = $region17
    $region16: #{tpu_custom_call.1} parent=1 // pred_region
      %s26 = ssub.s32 8192, 8192
      %27 = vsyncadd [#allocation3], %s26
      %s28 = sshll.u32 [#allocation2], 4
      %s29 = int_to_ptr.vmem [resolvable:$true] %s28
      %34 = dma.hbm_to_vmem [thread:$0]  %s3, 8192, %s29, [#allocation3], 256, 256, 16
    $region17: #{tpu_custom_call.1} parent=1 // pred_fallthru
      _
    // Predicated region
    $region18: #{tpu_custom_call.1} parent=1 // pred_check
      _
    $region19: #{tpu_custom_call.1} parent=1 // pred_check_branch
      %36 = sbr.rel (0) target = $region21
    $region20: #{tpu_custom_call.1} parent=1 // pred_region
      _
    $region21: #{tpu_custom_call.1} parent=1 // pred_fallthru
      _
    // Predicated region
    $region22: #{tpu_custom_call.1} parent=1 // pred_check
      _
    $region23: #{tpu_custom_call.1} parent=1 // pred_check_branch
      %38 = sbr.rel (0) target = $region25
    $region24: #{tpu_custom_call.1} parent=1 // pred_region
      %s40 = ssub.s32 8192, 8192
      %41 = vsyncadd [#allocation5], %s40
      %s42 = sshll.u32 [#allocation4], 4
      %s43 = int_to_ptr.vmem [resolvable:$true] %s42
      %48 = dma.hbm_to_vmem [thread:$0]  %s5, 8192, %s43, [#allocation5], 256, 256, 16
    $region25: #{tpu_custom_call.1} parent=1 // pred_fallthru
      _
    // Predicated region
    $region26: #{tpu_custom_call.1} parent=1 // pred_check
      _
    $region27: #{tpu_custom_call.1} parent=1 // pred_check_branch
      %50 = sbr.rel (0) target = $region29
    $region28: #{tpu_custom_call.1} parent=1 // pred_region
      _
    $region29: #{tpu_custom_call.1} parent=1 // pred_fallthru
      _
    // Predicated region
    $region30: #{tpu_custom_call.1} parent=1 // pred_check
      _
    $region31: #{tpu_custom_call.1} parent=1 // pred_check_branch
      %52 = sbr.rel (0) target = $region33
    $region32: #{tpu_custom_call.1} parent=1 // pred_region
      _
    $region33: #{tpu_custom_call.1} parent=1 // pred_fallthru
      _
    // Predicated region
    $region34: #{tpu_custom_call.1} parent=1 // pred_check
      _
    $region35: #{tpu_custom_call.1} parent=1 // pred_check_branch
      %54 = sbr.rel (0) target = $region37
    $region36: #{tpu_custom_call.1} parent=1 // pred_region
      _
    $region37: #{tpu_custom_call.1} parent=1 // pred_fallthru
      _
    // Predicated region
    $region38: #{tpu_custom_call.1} parent=1 // pred_check
      _
    $region39: #{tpu_custom_call.1} parent=1 // pred_check_branch
      %56 = sbr.rel (0) target = $region41
    $region40: #{tpu_custom_call.1} parent=1 // pred_region
      _
    $region41: #{tpu_custom_call.1} parent=1 // pred_fallthru
      _
    // Predicated region
    $region42: #{tpu_custom_call.1} parent=1 // pred_check
      _
    $region43: #{tpu_custom_call.1} parent=1 // pred_check_branch
      %58 = sbr.rel (0) target = $region45
    $region44: #{tpu_custom_call.1} parent=1 // pred_region
      %59 = dma.done [#allocation3], 8192
    $region45: #{tpu_custom_call.1} parent=1 // pred_fallthru
      _
    // Predicated region
    $region46: #{tpu_custom_call.1} parent=1 // pred_check
      _
    $region47: #{tpu_custom_call.1} parent=1 // pred_check_branch
      %61 = sbr.rel (0) target = $region49
    $region48: #{tpu_custom_call.1} parent=1 // pred_region
      %62 = dma.done [#allocation5], 8192
    $region49: #{tpu_custom_call.1} parent=1 // pred_fallthru
      _
    %v63 = vld [vmem:[%s0] sm:$0xff]
    %v64 = vld [vmem:[%s0 + $0x8] sm:$0xff]
    %v65 = vld [vmem:[%s0 + $0x10] sm:$0xff]
    %v66 = vld [vmem:[%s0 + $0x18] sm:$0xff]
    %v67 = vld [vmem:[%s0 + $0x20] sm:$0xff]
    %v68 = vld [vmem:[%s0 + $0x28] sm:$0xff]
    %v69 = vld [vmem:[%s0 + $0x30] sm:$0xff]
    %v70 = vld [vmem:[%s0 + $0x38] sm:$0xff]
    %v71 = vld [vmem:[%s1] sm:$0xff]
    %v72 = vld [vmem:[%s1 + $0x8] sm:$0xff]
    %v73 = vld [vmem:[%s1 + $0x10] sm:$0xff]
    %v74 = vld [vmem:[%s1 + $0x18] sm:$0xff]
    %v75 = vld [vmem:[%s1 + $0x20] sm:$0xff]
    %v76 = vld [vmem:[%s1 + $0x28] sm:$0xff]
    %v77 = vld [vmem:[%s1 + $0x30] sm:$0xff]
    %v78 = vld [vmem:[%s1 + $0x38] sm:$0xff]
    %v79 = vld [vmem:[%s2] sm:$0xf]
    %v81 = vlaneseq
    %v82 = vshrl.u32 %v81, 7
    %v83 = vsub.s32 0, %v82
    %v84 = vrot.slane %v79, %v83
    %v85 = vlaneseq
    %v86 = vshrl.u32 %v85, 7
    %v87 = vsub.s32 1, %v86
    %v88 = vrot.slane %v79, %v87
    %v89 = vlaneseq
    %v90 = vshrl.u32 %v89, 7
    %v91 = vsub.s32 2, %v90
    %v92 = vrot.slane %v79, %v91
    %v93 = vlaneseq
    %v94 = vshrl.u32 %v93, 7
    %v95 = vsub.s32 3, %v94
    %v96 = vrot.slane %v79, %v95
    %vm101 = vcmask 130048
    %v103 = vsel %vm101, %v63, 0
    %v106 = vsel %vm101, %v64, 0
    %v109 = vsel %vm101, %v65, 0
    %v112 = vsel %vm101, %v66, 0
    %v115 = vsel %vm101, %v67, 0
    %v118 = vsel %vm101, %v68, 0
    %v121 = vsel %vm101, %v69, 0
    %v124 = vsel %vm101, %v70, 0
    %126 = vmatprep.subr.mxu0 0.0
    %127 = vmatpush1.msra.mxu0 0.0
    %128 = vmatprep.subr.mxu0 0.0
    %129 = vmatpush1.msra.mxu0 0.0
    %130 = vmatprep.subr.mxu0 0.0
    %131 = vmatpush1.msra.mxu0 0.0
    %132 = vmatprep.subr.mxu0 0.0
    %133 = vmatpush1.msra.mxu0 0.0
    %134 = vmatprep.subr.mxu0 0.0
    %135 = vmatpush1.msra.mxu0 0.0
    %136 = vmatprep.subr.mxu0 0.0
    %137 = vmatpush1.msra.mxu0 0.0
    %138 = vmatprep.subr.mxu0 0.0
    %139 = vmatpush1.msra.mxu0 0.0
    %140 = vmatprep.subr.mxu0 0.0
    %141 = vmatpush1.msra.mxu0 0.0
    %142 = vmatprep.subr.mxu0 0.0
    %143 = vmatpush1.msra.mxu0 0.0
    %144 = vmatprep.subr.mxu0 0.0
    %145 = vmatpush1.msra.mxu0 0.0
    %146 = vmatprep.subr.mxu0 0.0
    %147 = vmatpush1.msra.mxu0 0.0
    %148 = vmatprep.subr.mxu0 0.0
    %149 = vmatpush1.msra.mxu0 0.0
    %150 = vmatprep.subr.mxu0 0.0
    %151 = vmatpush1.msra.mxu0 0.0
    %152 = vmatprep.subr.mxu0 0.0
    %153 = vmatpush1.msra.mxu0 0.0
    %154 = vmatprep.subr.mxu0 %v76
    %155 = vmatpush1.msra.mxu0 %v75
    %156 = vmatprep.subr.mxu0 %v72
    %157 = vmatpush1.msra.mxu0 %v71
    %158 = vmatprep.subr.mxu0 0.0
    %159 = vmatpush2.msra.mxu0 0.0
    %160 = vmatprep.subr.mxu0 0.0
    %161 = vmatpush2.msra.mxu0 0.0
    %162 = vmatprep.subr.mxu0 0.0
    %163 = vmatpush2.msra.mxu0 0.0
    %164 = vmatprep.subr.mxu0 0.0
    %165 = vmatpush2.msra.mxu0 0.0
    %166 = vmatprep.subr.mxu0 0.0
    %167 = vmatpush2.msra.mxu0 0.0
    %168 = vmatprep.subr.mxu0 0.0
    %169 = vmatpush2.msra.mxu0 0.0
    %170 = vmatprep.subr.mxu0 0.0
    %171 = vmatpush2.msra.mxu0 0.0
    %172 = vmatprep.subr.mxu0 0.0
    %173 = vmatpush2.msra.mxu0 0.0
    %174 = vmatprep.subr.mxu0 0.0
    %175 = vmatpush2.msra.mxu0 0.0
    %176 = vmatprep.subr.mxu0 0.0
    %177 = vmatpush2.msra.mxu0 0.0
    %178 = vmatprep.subr.mxu0 0.0
    %179 = vmatpush2.msra.mxu0 0.0
    %180 = vmatprep.subr.mxu0 0.0
    %181 = vmatpush2.msra.mxu0 0.0
    %182 = vmatprep.subr.mxu0 0.0
    %183 = vmatpush2.msra.mxu0 0.0
    %184 = vmatprep.subr.mxu0 0.0
    %185 = vmatpush2.msra.mxu0 0.0
    %186 = vmatprep.subr.mxu0 0.0
    %187 = vmatpush2.msra.mxu0 0.0
    %188 = vmatprep.subr.mxu0 0.0
    %189 = vmatpush2.msra.mxu0 0.0
    %190 = vmatprep.mubr.f32.mxu0 0.0
    %191 = vmatmul.mubr.f32.gmra.mxu0 %v103
    %v192 = vpop.f32.mrf.mxu0
    %v193 = vadd.f32 %v84, %v192
    %v194 = vpop.f32.mrf.mxu0
    %v195 = vadd.f32 %v88, %v194
    %196 = vmatprep.mubr.f32.mxu0 0.0
    %197 = vmatmul.mubr.f32.gmra.mxu0 %v106
    %v198 = vpop.f32.mrf.mxu0
    %v199 = vadd.f32 %v84, %v198
    %v200 = vpop.f32.mrf.mxu0
    %v201 = vadd.f32 %v88, %v200
    %202 = vmatprep.mubr.f32.mxu0 0.0
    %203 = vmatmul.mubr.f32.gmra.mxu0 %v109
    %v204 = vpop.f32.mrf.mxu0
    %v205 = vadd.f32 %v84, %v204
    %v206 = vpop.f32.mrf.mxu0
    %v207 = vadd.f32 %v88, %v206
    %208 = vmatprep.mubr.f32.mxu0 0.0
    %209 = vmatmul.mubr.f32.gmra.mxu0 %v112
    %v210 = vpop.f32.mrf.mxu0
    %v211 = vadd.f32 %v84, %v210
    %v212 = vpop.f32.mrf.mxu0
    %v213 = vadd.f32 %v88, %v212
    %214 = vmatprep.mubr.f32.mxu0 0.0
    %215 = vmatmul.mubr.f32.gmra.mxu0 %v115
    %v216 = vpop.f32.mrf.mxu0
    %v217 = vadd.f32 %v84, %v216
    %v218 = vpop.f32.mrf.mxu0
    %v219 = vadd.f32 %v88, %v218
    %220 = vmatprep.mubr.f32.mxu0 0.0
    %221 = vmatmul.mubr.f32.gmra.mxu0 %v118
    %v222 = vpop.f32.mrf.mxu0
    %v223 = vadd.f32 %v84, %v222
    %v224 = vpop.f32.mrf.mxu0
    %v225 = vadd.f32 %v88, %v224
    %226 = vmatprep.mubr.f32.mxu0 0.0
    %227 = vmatmul.mubr.f32.gmra.mxu0 %v121
    %v228 = vpop.f32.mrf.mxu0
    %v229 = vadd.f32 %v84, %v228
    %v230 = vpop.f32.mrf.mxu0
    %v231 = vadd.f32 %v88, %v230
    %232 = vmatprep.mubr.f32.mxu0 0.0
    %233 = vmatmul.mubr.f32.gmra.mxu0 %v124
    %v234 = vpop.f32.mrf.mxu0
    %v235 = vadd.f32 %v84, %v234
    %v236 = vpop.f32.mrf.mxu0
    %v237 = vadd.f32 %v88, %v236
    %238 = vdwg.mxu0
    %239 = vmatprep.subr.mxu0 0.0
    %240 = vmatpush1.msra.mxu0 0.0
    %241 = vmatprep.subr.mxu0 0.0
    %242 = vmatpush1.msra.mxu0 0.0
    %243 = vmatprep.subr.mxu0 0.0
    %244 = vmatpush1.msra.mxu0 0.0
    %245 = vmatprep.subr.mxu0 0.0
    %246 = vmatpush1.msra.mxu0 0.0
    %247 = vmatprep.subr.mxu0 0.0
    %248 = vmatpush1.msra.mxu0 0.0
    %249 = vmatprep.subr.mxu0 0.0
    %250 = vmatpush1.msra.mxu0 0.0
    %251 = vmatprep.subr.mxu0 0.0
    %252 = vmatpush1.msra.mxu0 0.0
    %253 = vmatprep.subr.mxu0 0.0
    %254 = vmatpush1.msra.mxu0 0.0
    %255 = vmatprep.subr.mxu0 0.0
    %256 = vmatpush1.msra.mxu0 0.0
    %257 = vmatprep.subr.mxu0 0.0
    %258 = vmatpush1.msra.mxu0 0.0
    %259 = vmatprep.subr.mxu0 0.0
    %260 = vmatpush1.msra.mxu0 0.0
    %261 = vmatprep.subr.mxu0 0.0
    %262 = vmatpush1.msra.mxu0 0.0
    %263 = vmatprep.subr.mxu0 0.0
    %264 = vmatpush1.msra.mxu0 0.0
    %265 = vmatprep.subr.mxu0 0.0
    %266 = vmatpush1.msra.mxu0 0.0
    %267 = vmatprep.subr.mxu0 %v78
    %268 = vmatpush1.msra.mxu0 %v77
    %269 = vmatprep.subr.mxu0 %v74
    %270 = vmatpush1.msra.mxu0 %v73
    %271 = vmatprep.subr.mxu0 0.0
    %272 = vmatpush2.msra.mxu0 0.0
    %273 = vmatprep.subr.mxu0 0.0
    %274 = vmatpush2.msra.mxu0 0.0
    %275 = vmatprep.subr.mxu0 0.0
    %276 = vmatpush2.msra.mxu0 0.0
    %277 = vmatprep.subr.mxu0 0.0
    %278 = vmatpush2.msra.mxu0 0.0
    %279 = vmatprep.subr.mxu0 0.0
    %280 = vmatpush2.msra.mxu0 0.0
    %281 = vmatprep.subr.mxu0 0.0
    %282 = vmatpush2.msra.mxu0 0.0
    %283 = vmatprep.subr.mxu0 0.0
    %284 = vmatpush2.msra.mxu0 0.0
    %285 = vmatprep.subr.mxu0 0.0
    %286 = vmatpush2.msra.mxu0 0.0
    %287 = vmatprep.subr.mxu0 0.0
    %288 = vmatpush2.msra.mxu0 0.0
    %289 = vmatprep.subr.mxu0 0.0
    %290 = vmatpush2.msra.mxu0 0.0
    %291 = vmatprep.subr.mxu0 0.0
    %292 = vmatpush2.msra.mxu0 0.0
    %293 = vmatprep.subr.mxu0 0.0
    %294 = vmatpush2.msra.mxu0 0.0
    %295 = vmatprep.subr.mxu0 0.0
    %296 = vmatpush2.msra.mxu0 0.0
    %297 = vmatprep.subr.mxu0 0.0
    %298 = vmatpush2.msra.mxu0 0.0
    %299 = vmatprep.subr.mxu0 0.0
    %300 = vmatpush2.msra.mxu0 0.0
    %301 = vmatprep.subr.mxu0 0.0
    %302 = vmatpush2.msra.mxu0 0.0
    %303 = vmatprep.mubr.f32.mxu0 0.0
    %304 = vmatmul.mubr.f32.gmra.mxu0 %v103
    %v305 = vpop.f32.mrf.mxu0
    %v306 = vadd.f32 %v92, %v305
    %v307 = vpop.f32.mrf.mxu0
    %v308 = vadd.f32 %v96, %v307
    %309 = vmatprep.mubr.f32.mxu0 0.0
    %310 = vmatmul.mubr.f32.gmra.mxu0 %v106
    %v311 = vpop.f32.mrf.mxu0
    %v312 = vadd.f32 %v92, %v311
    %v313 = vpop.f32.mrf.mxu0
    %v314 = vadd.f32 %v96, %v313
    %315 = vmatprep.mubr.f32.mxu0 0.0
    %316 = vmatmul.mubr.f32.gmra.mxu0 %v109
    %v317 = vpop.f32.mrf.mxu0
    %v318 = vadd.f32 %v92, %v317
    %v319 = vpop.f32.mrf.mxu0
    %v320 = vadd.f32 %v96, %v319
    %321 = vmatprep.mubr.f32.mxu0 0.0
    %322 = vmatmul.mubr.f32.gmra.mxu0 %v112
    %v323 = vpop.f32.mrf.mxu0
    %v324 = vadd.f32 %v92, %v323
    %v325 = vpop.f32.mrf.mxu0
    %v326 = vadd.f32 %v96, %v325
    %327 = vmatprep.mubr.f32.mxu0 0.0
    %328 = vmatmul.mubr.f32.gmra.mxu0 %v115
    %v329 = vpop.f32.mrf.mxu0
    %v330 = vadd.f32 %v92, %v329
    %v331 = vpop.f32.mrf.mxu0
    %v332 = vadd.f32 %v96, %v331
    %333 = vmatprep.mubr.f32.mxu0 0.0
    %334 = vmatmul.mubr.f32.gmra.mxu0 %v118
    %v335 = vpop.f32.mrf.mxu0
    %v336 = vadd.f32 %v92, %v335
    %v337 = vpop.f32.mrf.mxu0
    %v338 = vadd.f32 %v96, %v337
    %339 = vmatprep.mubr.f32.mxu0 0.0
    %340 = vmatmul.mubr.f32.gmra.mxu0 %v121
    %v341 = vpop.f32.mrf.mxu0
    %v342 = vadd.f32 %v92, %v341
    %v343 = vpop.f32.mrf.mxu0
    %v344 = vadd.f32 %v96, %v343
    %345 = vmatprep.mubr.f32.mxu0 0.0
    %346 = vmatmul.mubr.f32.gmra.mxu0 %v124
    %v347 = vpop.f32.mrf.mxu0
    %v348 = vadd.f32 %v92, %v347
    %v349 = vpop.f32.mrf.mxu0
    %v350 = vadd.f32 %v96, %v349
    %351 = vdwg.mxu0
    %v352 = vmax.f32 %v193, 0.0
    %v353 = vmax.f32 %v195, 0.0
    %v354 = vmax.f32 %v306, 0.0
    %v355 = vmax.f32 %v308, 0.0
    %v356 = vmax.f32 %v199, 0.0
    %v357 = vmax.f32 %v201, 0.0
    %v358 = vmax.f32 %v312, 0.0
    %v359 = vmax.f32 %v314, 0.0
    %v360 = vmax.f32 %v205, 0.0
    %v361 = vmax.f32 %v207, 0.0
    %v362 = vmax.f32 %v318, 0.0
    %v363 = vmax.f32 %v320, 0.0
    %v364 = vmax.f32 %v211, 0.0
    %v365 = vmax.f32 %v213, 0.0
    %v366 = vmax.f32 %v324, 0.0
    %v367 = vmax.f32 %v326, 0.0
    %v368 = vmax.f32 %v217, 0.0
    %v369 = vmax.f32 %v219, 0.0
    %v370 = vmax.f32 %v330, 0.0
    %v371 = vmax.f32 %v332, 0.0
    %v372 = vmax.f32 %v223, 0.0
    %v373 = vmax.f32 %v225, 0.0
    %v374 = vmax.f32 %v336, 0.0
    %v375 = vmax.f32 %v338, 0.0
    %v376 = vmax.f32 %v229, 0.0
    %v377 = vmax.f32 %v231, 0.0
    %v378 = vmax.f32 %v342, 0.0
    %v379 = vmax.f32 %v344, 0.0
    %v380 = vmax.f32 %v235, 0.0
    %v381 = vmax.f32 %v237, 0.0
    %v382 = vmax.f32 %v348, 0.0
    %v383 = vmax.f32 %v350, 0.0
    %v384 = vld [vmem:[#allocation2] sm:$0xff]
    %v385 = vld [vmem:[#allocation2 + $0x8] sm:$0xff]
    %v386 = vld [vmem:[#allocation2 + $0x10] sm:$0xff]
    %v387 = vld [vmem:[#allocation2 + $0x18] sm:$0xff]
    %v388 = vld [vmem:[#allocation2 + $0x20] sm:$0xff]
    %v389 = vld [vmem:[#allocation2 + $0x28] sm:$0xff]
    %v390 = vld [vmem:[#allocation2 + $0x30] sm:$0xff]
    %v391 = vld [vmem:[#allocation2 + $0x38] sm:$0xff]
    %v392 = vld [vmem:[#allocation2 + $0x40] sm:$0xff]
    %v393 = vld [vmem:[#allocation2 + $0x48] sm:$0xff]
    %v394 = vld [vmem:[#allocation2 + $0x50] sm:$0xff]
    %v395 = vld [vmem:[#allocation2 + $0x58] sm:$0xff]
    %v396 = vld [vmem:[#allocation2 + $0x60] sm:$0xff]
    %v397 = vld [vmem:[#allocation2 + $0x68] sm:$0xff]
    %v398 = vld [vmem:[#allocation2 + $0x70] sm:$0xff]
    %v399 = vld [vmem:[#allocation2 + $0x78] sm:$0xff]
    %v400 = vld [vmem:[#allocation2 + $0x80] sm:$0xff]
    %v401 = vld [vmem:[#allocation2 + $0x88] sm:$0xff]
    %v402 = vld [vmem:[#allocation2 + $0x90] sm:$0xff]
    %v403 = vld [vmem:[#allocation2 + $0x98] sm:$0xff]
    %v404 = vld [vmem:[#allocation2 + $0xa0] sm:$0xff]
    %v405 = vld [vmem:[#allocation2 + $0xa8] sm:$0xff]
    %v406 = vld [vmem:[#allocation2 + $0xb0] sm:$0xff]
    %v407 = vld [vmem:[#allocation2 + $0xb8] sm:$0xff]
    %v408 = vld [vmem:[#allocation2 + $0xc0] sm:$0xff]
    %v409 = vld [vmem:[#allocation2 + $0xc8] sm:$0xff]
    %v410 = vld [vmem:[#allocation2 + $0xd0] sm:$0xff]
    %v411 = vld [vmem:[#allocation2 + $0xd8] sm:$0xff]
    %v412 = vld [vmem:[#allocation2 + $0xe0] sm:$0xff]
    %v413 = vld [vmem:[#allocation2 + $0xe8] sm:$0xff]
    %v414 = vld [vmem:[#allocation2 + $0xf0] sm:$0xff]
    %v415 = vld [vmem:[#allocation2 + $0xf8] sm:$0xff]
    %v416 = vld [vmem:[#allocation2 + $0x100] sm:$0xff]
    %v417 = vld [vmem:[#allocation2 + $0x108] sm:$0xff]
    %v418 = vld [vmem:[#allocation2 + $0x110] sm:$0xff]
    %v419 = vld [vmem:[#allocation2 + $0x118] sm:$0xff]
    %v420 = vld [vmem:[#allocation2 + $0x120] sm:$0xff]
    %v421 = vld [vmem:[#allocation2 + $0x128] sm:$0xff]
    %v422 = vld [vmem:[#allocation2 + $0x130] sm:$0xff]
    %v423 = vld [vmem:[#allocation2 + $0x138] sm:$0xff]
    %v424 = vld [vmem:[#allocation2 + $0x140] sm:$0xff]
    %v425 = vld [vmem:[#allocation2 + $0x148] sm:$0xff]
    %v426 = vld [vmem:[#allocation2 + $0x150] sm:$0xff]
    %v427 = vld [vmem:[#allocation2 + $0x158] sm:$0xff]
    %v428 = vld [vmem:[#allocation2 + $0x160] sm:$0xff]
    %v429 = vld [vmem:[#allocation2 + $0x168] sm:$0xff]
    %v430 = vld [vmem:[#allocation2 + $0x170] sm:$0xff]
    %v431 = vld [vmem:[#allocation2 + $0x178] sm:$0xff]
    %v432 = vld [vmem:[#allocation2 + $0x180] sm:$0xff]
    %v433 = vld [vmem:[#allocation2 + $0x188] sm:$0xff]
    %v434 = vld [vmem:[#allocation2 + $0x190] sm:$0xff]
    %v435 = vld [vmem:[#allocation2 + $0x198] sm:$0xff]
    %v436 = vld [vmem:[#allocation2 + $0x1a0] sm:$0xff]
    %v437 = vld [vmem:[#allocation2 + $0x1a8] sm:$0xff]
    %v438 = vld [vmem:[#allocation2 + $0x1b0] sm:$0xff]
    %v439 = vld [vmem:[#allocation2 + $0x1b8] sm:$0xff]
    %v440 = vld [vmem:[#allocation2 + $0x1c0] sm:$0xff]
    %v441 = vld [vmem:[#allocation2 + $0x1c8] sm:$0xff]
    %v442 = vld [vmem:[#allocation2 + $0x1d0] sm:$0xff]
    %v443 = vld [vmem:[#allocation2 + $0x1d8] sm:$0xff]
    %v444 = vld [vmem:[#allocation2 + $0x1e0] sm:$0xff]
    %v445 = vld [vmem:[#allocation2 + $0x1e8] sm:$0xff]
    %v446 = vld [vmem:[#allocation2 + $0x1f0] sm:$0xff]
    %v447 = vld [vmem:[#allocation2 + $0x1f8] sm:$0xff]
    %v448 = vld [vmem:[%s4] sm:$0x3]
    %v450 = vlaneseq
    %v451 = vshrl.u32 %v450, 7
    %v452 = vsub.s32 0, %v451
    %v453 = vrot.slane %v448, %v452
    %v454 = vlaneseq
    %v455 = vshrl.u32 %v454, 7
    %v456 = vsub.s32 1, %v455
    %v457 = vrot.slane %v448, %v456
    %460 = vmatprep.subr.mxu0 %v415
    %461 = vmatpush1.msra.mxu0 %v414
    %462 = vmatprep.subr.mxu0 %v413
    %463 = vmatpush1.msra.mxu0 %v412
    %464 = vmatprep.subr.mxu0 %v411
    %465 = vmatpush1.msra.mxu0 %v410
    %466 = vmatprep.subr.mxu0 %v409
    %467 = vmatpush1.msra.mxu0 %v408
    %468 = vmatprep.subr.mxu0 %v407
    %469 = vmatpush1.msra.mxu0 %v406
    %470 = vmatprep.subr.mxu0 %v405
    %471 = vmatpush1.msra.mxu0 %v404
    %472 = vmatprep.subr.mxu0 %v403
    %473 = vmatpush1.msra.mxu0 %v402
    %474 = vmatprep.subr.mxu0 %v401
    %475 = vmatpush1.msra.mxu0 %v400
    %476 = vmatprep.subr.mxu0 %v399
    %477 = vmatpush1.msra.mxu0 %v398
    %478 = vmatprep.subr.mxu0 %v397
    %479 = vmatpush1.msra.mxu0 %v396
    %480 = vmatprep.subr.mxu0 %v395
    %481 = vmatpush1.msra.mxu0 %v394
    %482 = vmatprep.subr.mxu0 %v393
    %483 = vmatpush1.msra.mxu0 %v392
    %484 = vmatprep.subr.mxu0 %v391
    %485 = vmatpush1.msra.mxu0 %v390
    %486 = vmatprep.subr.mxu0 %v389
    %487 = vmatpush1.msra.mxu0 %v388
    %488 = vmatprep.subr.mxu0 %v387
    %489 = vmatpush1.msra.mxu0 %v386
    %490 = vmatprep.subr.mxu0 %v385
    %491 = vmatpush1.msra.mxu0 %v384
    %492 = vmatprep.subr.mxu0 %v447
    %493 = vmatpush2.msra.mxu0 %v446
    %494 = vmatprep.subr.mxu0 %v445
    %495 = vmatpush2.msra.mxu0 %v444
    %496 = vmatprep.subr.mxu0 %v443
    %497 = vmatpush2.msra.mxu0 %v442
    %498 = vmatprep.subr.mxu0 %v441
    %499 = vmatpush2.msra.mxu0 %v440
    %500 = vmatprep.subr.mxu0 %v439
    %501 = vmatpush2.msra.mxu0 %v438
    %502 = vmatprep.subr.mxu0 %v437
    %503 = vmatpush2.msra.mxu0 %v436
    %504 = vmatprep.subr.mxu0 %v435
    %505 = vmatpush2.msra.mxu0 %v434
    %506 = vmatprep.subr.mxu0 %v433
    %507 = vmatpush2.msra.mxu0 %v432
    %508 = vmatprep.subr.mxu0 %v431
    %509 = vmatpush2.msra.mxu0 %v430
    %510 = vmatprep.subr.mxu0 %v429
    %511 = vmatpush2.msra.mxu0 %v428
    %512 = vmatprep.subr.mxu0 %v427
    %513 = vmatpush2.msra.mxu0 %v426
    %514 = vmatprep.subr.mxu0 %v425
    %515 = vmatpush2.msra.mxu0 %v424
    %516 = vmatprep.subr.mxu0 %v423
    %517 = vmatpush2.msra.mxu0 %v422
    %518 = vmatprep.subr.mxu0 %v421
    %519 = vmatpush2.msra.mxu0 %v420
    %520 = vmatprep.subr.mxu0 %v419
    %521 = vmatpush2.msra.mxu0 %v418
    %522 = vmatprep.subr.mxu0 %v417
    %523 = vmatpush2.msra.mxu0 %v416
    %524 = vmatprep.mubr.f32.mxu0 %v353
    %525 = vmatmul.mubr.f32.gmra.mxu0 %v352
    %v526 = vpop.f32.mrf.mxu0
    %v527 = vadd.f32 %v453, %v526
    %v528 = vpop.f32.mrf.mxu0
    %v529 = vadd.f32 %v457, %v528
    %530 = vmatprep.mubr.f32.mxu0 %v357
    %531 = vmatmul.mubr.f32.gmra.mxu0 %v356
    %v532 = vpop.f32.mrf.mxu0
    %v533 = vadd.f32 %v453, %v532
    %v534 = vpop.f32.mrf.mxu0
    %v535 = vadd.f32 %v457, %v534
    %536 = vmatprep.mubr.f32.mxu0 %v361
    %537 = vmatmul.mubr.f32.gmra.mxu0 %v360
    %v538 = vpop.f32.mrf.mxu0
    %v539 = vadd.f32 %v453, %v538
    %v540 = vpop.f32.mrf.mxu0
    %v541 = vadd.f32 %v457, %v540
    %542 = vmatprep.mubr.f32.mxu0 %v365
    %543 = vmatmul.mubr.f32.gmra.mxu0 %v364
    %v544 = vpop.f32.mrf.mxu0
    %v545 = vadd.f32 %v453, %v544
    %v546 = vpop.f32.mrf.mxu0
    %v547 = vadd.f32 %v457, %v546
    %548 = vmatprep.mubr.f32.mxu0 %v369
    %549 = vmatmul.mubr.f32.gmra.mxu0 %v368
    %v550 = vpop.f32.mrf.mxu0
    %v551 = vadd.f32 %v453, %v550
    %v552 = vpop.f32.mrf.mxu0
    %v553 = vadd.f32 %v457, %v552
    %554 = vmatprep.mubr.f32.mxu0 %v373
    %555 = vmatmul.mubr.f32.gmra.mxu0 %v372
    %v556 = vpop.f32.mrf.mxu0
    %v557 = vadd.f32 %v453, %v556
    %v558 = vpop.f32.mrf.mxu0
    %v559 = vadd.f32 %v457, %v558
    %560 = vmatprep.mubr.f32.mxu0 %v377
    %561 = vmatmul.mubr.f32.gmra.mxu0 %v376
    %v562 = vpop.f32.mrf.mxu0
    %v563 = vadd.f32 %v453, %v562
    %v564 = vpop.f32.mrf.mxu0
    %v565 = vadd.f32 %v457, %v564
    %566 = vmatprep.mubr.f32.mxu0 %v381
    %567 = vmatmul.mubr.f32.gmra.mxu0 %v380
    %v568 = vpop.f32.mrf.mxu0
    %v569 = vadd.f32 %v453, %v568
    %v570 = vpop.f32.mrf.mxu0
    %v571 = vadd.f32 %v457, %v570
    %572 = vdwg.mxu0
    %v573 = vmax.f32 %v527, 0.0
    %v574 = vmax.f32 %v529, 0.0
    %v575 = vmax.f32 %v533, 0.0
    %v576 = vmax.f32 %v535, 0.0
    %v577 = vmax.f32 %v539, 0.0
    %v578 = vmax.f32 %v541, 0.0
    %v579 = vmax.f32 %v545, 0.0
    %v580 = vmax.f32 %v547, 0.0
    %v581 = vmax.f32 %v551, 0.0
    %v582 = vmax.f32 %v553, 0.0
    %v583 = vmax.f32 %v557, 0.0
    %v584 = vmax.f32 %v559, 0.0
    %v585 = vmax.f32 %v563, 0.0
    %v586 = vmax.f32 %v565, 0.0
    %v587 = vmax.f32 %v569, 0.0
    %v588 = vmax.f32 %v571, 0.0
    %v589 = vld [vmem:[#allocation4] sm:$0xff]
    %v590 = vld [vmem:[#allocation4 + $0x8] sm:$0xff]
    %v591 = vld [vmem:[#allocation4 + $0x10] sm:$0xff]
    %v592 = vld [vmem:[#allocation4 + $0x18] sm:$0xff]
    %v593 = vld [vmem:[#allocation4 + $0x20] sm:$0xff]
    %v594 = vld [vmem:[#allocation4 + $0x28] sm:$0xff]
    %v595 = vld [vmem:[#allocation4 + $0x30] sm:$0xff]
    %v596 = vld [vmem:[#allocation4 + $0x38] sm:$0xff]
    %v597 = vld [vmem:[#allocation4 + $0x40] sm:$0xff]
    %v598 = vld [vmem:[#allocation4 + $0x48] sm:$0xff]
    %v599 = vld [vmem:[#allocation4 + $0x50] sm:$0xff]
    %v600 = vld [vmem:[#allocation4 + $0x58] sm:$0xff]
    %v601 = vld [vmem:[#allocation4 + $0x60] sm:$0xff]
    %v602 = vld [vmem:[#allocation4 + $0x68] sm:$0xff]
    %v603 = vld [vmem:[#allocation4 + $0x70] sm:$0xff]
    %v604 = vld [vmem:[#allocation4 + $0x78] sm:$0xff]
    %v605 = vld [vmem:[#allocation4 + $0x80] sm:$0xff]
    %v606 = vld [vmem:[#allocation4 + $0x88] sm:$0xff]
    %v607 = vld [vmem:[#allocation4 + $0x90] sm:$0xff]
    %v608 = vld [vmem:[#allocation4 + $0x98] sm:$0xff]
    %v609 = vld [vmem:[#allocation4 + $0xa0] sm:$0xff]
    %v610 = vld [vmem:[#allocation4 + $0xa8] sm:$0xff]
    %v611 = vld [vmem:[#allocation4 + $0xb0] sm:$0xff]
    %v612 = vld [vmem:[#allocation4 + $0xb8] sm:$0xff]
    %v613 = vld [vmem:[#allocation4 + $0xc0] sm:$0xff]
    %v614 = vld [vmem:[#allocation4 + $0xc8] sm:$0xff]
    %v615 = vld [vmem:[#allocation4 + $0xd0] sm:$0xff]
    %v616 = vld [vmem:[#allocation4 + $0xd8] sm:$0xff]
    %v617 = vld [vmem:[#allocation4 + $0xe0] sm:$0xff]
    %v618 = vld [vmem:[#allocation4 + $0xe8] sm:$0xff]
    %v619 = vld [vmem:[#allocation4 + $0xf0] sm:$0xff]
    %v620 = vld [vmem:[#allocation4 + $0xf8] sm:$0xff]
    %v621 = vld [vmem:[#allocation4 + $0x100] sm:$0xff]
    %v622 = vld [vmem:[#allocation4 + $0x108] sm:$0xff]
    %v623 = vld [vmem:[#allocation4 + $0x110] sm:$0xff]
    %v624 = vld [vmem:[#allocation4 + $0x118] sm:$0xff]
    %v625 = vld [vmem:[#allocation4 + $0x120] sm:$0xff]
    %v626 = vld [vmem:[#allocation4 + $0x128] sm:$0xff]
    %v627 = vld [vmem:[#allocation4 + $0x130] sm:$0xff]
    %v628 = vld [vmem:[#allocation4 + $0x138] sm:$0xff]
    %v629 = vld [vmem:[#allocation4 + $0x140] sm:$0xff]
    %v630 = vld [vmem:[#allocation4 + $0x148] sm:$0xff]
    %v631 = vld [vmem:[#allocation4 + $0x150] sm:$0xff]
    %v632 = vld [vmem:[#allocation4 + $0x158] sm:$0xff]
    %v633 = vld [vmem:[#allocation4 + $0x160] sm:$0xff]
    %v634 = vld [vmem:[#allocation4 + $0x168] sm:$0xff]
    %v635 = vld [vmem:[#allocation4 + $0x170] sm:$0xff]
    %v636 = vld [vmem:[#allocation4 + $0x178] sm:$0xff]
    %v637 = vld [vmem:[#allocation4 + $0x180] sm:$0xff]
    %v638 = vld [vmem:[#allocation4 + $0x188] sm:$0xff]
    %v639 = vld [vmem:[#allocation4 + $0x190] sm:$0xff]
    %v640 = vld [vmem:[#allocation4 + $0x198] sm:$0xff]
    %v641 = vld [vmem:[#allocation4 + $0x1a0] sm:$0xff]
    %v642 = vld [vmem:[#allocation4 + $0x1a8] sm:$0xff]
    %v643 = vld [vmem:[#allocation4 + $0x1b0] sm:$0xff]
    %v644 = vld [vmem:[#allocation4 + $0x1b8] sm:$0xff]
    %v645 = vld [vmem:[#allocation4 + $0x1c0] sm:$0xff]
    %v646 = vld [vmem:[#allocation4 + $0x1c8] sm:$0xff]
    %v647 = vld [vmem:[#allocation4 + $0x1d0] sm:$0xff]
    %v648 = vld [vmem:[#allocation4 + $0x1d8] sm:$0xff]
    %v649 = vld [vmem:[#allocation4 + $0x1e0] sm:$0xff]
    %v650 = vld [vmem:[#allocation4 + $0x1e8] sm:$0xff]
    %v651 = vld [vmem:[#allocation4 + $0x1f0] sm:$0xff]
    %v652 = vld [vmem:[#allocation4 + $0x1f8] sm:$0xff]
    %v653 = vld [vmem:[%s6] sm:$0x3]
    %v655 = vlaneseq
    %v656 = vshrl.u32 %v655, 7
    %v657 = vsub.s32 0, %v656
    %v658 = vrot.slane %v653, %v657
    %v659 = vlaneseq
    %v660 = vshrl.u32 %v659, 7
    %v661 = vsub.s32 1, %v660
    %v662 = vrot.slane %v653, %v661
    %665 = vmatprep.subr.mxu0 %v620
    %666 = vmatpush1.msra.mxu0 %v619
    %667 = vmatprep.subr.mxu0 %v618
    %668 = vmatpush1.msra.mxu0 %v617
    %669 = vmatprep.subr.mxu0 %v616
    %670 = vmatpush1.msra.mxu0 %v615
    %671 = vmatprep.subr.mxu0 %v614
    %672 = vmatpush1.msra.mxu0 %v613
    %673 = vmatprep.subr.mxu0 %v612
    %674 = vmatpush1.msra.mxu0 %v611
    %675 = vmatprep.subr.mxu0 %v610
    %676 = vmatpush1.msra.mxu0 %v609
    %677 = vmatprep.subr.mxu0 %v608
    %678 = vmatpush1.msra.mxu0 %v607
    %679 = vmatprep.subr.mxu0 %v606
    %680 = vmatpush1.msra.mxu0 %v605
    %681 = vmatprep.subr.mxu0 %v604
    %682 = vmatpush1.msra.mxu0 %v603
    %683 = vmatprep.subr.mxu0 %v602
    %684 = vmatpush1.msra.mxu0 %v601
    %685 = vmatprep.subr.mxu0 %v600
    %686 = vmatpush1.msra.mxu0 %v599
    %687 = vmatprep.subr.mxu0 %v598
    %688 = vmatpush1.msra.mxu0 %v597
    %689 = vmatprep.subr.mxu0 %v596
    %690 = vmatpush1.msra.mxu0 %v595
    %691 = vmatprep.subr.mxu0 %v594
    %692 = vmatpush1.msra.mxu0 %v593
    %693 = vmatprep.subr.mxu0 %v592
    %694 = vmatpush1.msra.mxu0 %v591
    %695 = vmatprep.subr.mxu0 %v590
    %696 = vmatpush1.msra.mxu0 %v589
    %697 = vmatprep.subr.mxu0 %v652
    %698 = vmatpush2.msra.mxu0 %v651
    %699 = vmatprep.subr.mxu0 %v650
    %700 = vmatpush2.msra.mxu0 %v649
    %701 = vmatprep.subr.mxu0 %v648
    %702 = vmatpush2.msra.mxu0 %v647
    %703 = vmatprep.subr.mxu0 %v646
    %704 = vmatpush2.msra.mxu0 %v645
    %705 = vmatprep.subr.mxu0 %v644
    %706 = vmatpush2.msra.mxu0 %v643
    %707 = vmatprep.subr.mxu0 %v642
    %708 = vmatpush2.msra.mxu0 %v641
    %709 = vmatprep.subr.mxu0 %v640
    %710 = vmatpush2.msra.mxu0 %v639
    %711 = vmatprep.subr.mxu0 %v638
    %712 = vmatpush2.msra.mxu0 %v637
    %713 = vmatprep.subr.mxu0 %v636
    %714 = vmatpush2.msra.mxu0 %v635
    %715 = vmatprep.subr.mxu0 %v634
    %716 = vmatpush2.msra.mxu0 %v633
    %717 = vmatprep.subr.mxu0 %v632
    %718 = vmatpush2.msra.mxu0 %v631
    %719 = vmatprep.subr.mxu0 %v630
    %720 = vmatpush2.msra.mxu0 %v629
    %721 = vmatprep.subr.mxu0 %v628
    %722 = vmatpush2.msra.mxu0 %v627
    %723 = vmatprep.subr.mxu0 %v626
    %724 = vmatpush2.msra.mxu0 %v625
    %725 = vmatprep.subr.mxu0 %v624
    %726 = vmatpush2.msra.mxu0 %v623
    %727 = vmatprep.subr.mxu0 %v622
    %728 = vmatpush2.msra.mxu0 %v621
    %729 = vmatprep.mubr.f32.mxu0 %v355
    %730 = vmatmul.mubr.f32.gmra.mxu0 %v354
    %v731 = vpop.f32.mrf.mxu0
    %v732 = vadd.f32 %v658, %v731
    %v733 = vpop.f32.mrf.mxu0
    %v734 = vadd.f32 %v662, %v733
    %735 = vmatprep.mubr.f32.mxu0 %v359
    %736 = vmatmul.mubr.f32.gmra.mxu0 %v358
    %v737 = vpop.f32.mrf.mxu0
    %v738 = vadd.f32 %v658, %v737
    %v739 = vpop.f32.mrf.mxu0
    %v740 = vadd.f32 %v662, %v739
    %741 = vmatprep.mubr.f32.mxu0 %v363
    %742 = vmatmul.mubr.f32.gmra.mxu0 %v362
    %v743 = vpop.f32.mrf.mxu0
    %v744 = vadd.f32 %v658, %v743
    %v745 = vpop.f32.mrf.mxu0
    %v746 = vadd.f32 %v662, %v745
    %747 = vmatprep.mubr.f32.mxu0 %v367
    %748 = vmatmul.mubr.f32.gmra.mxu0 %v366
    %v749 = vpop.f32.mrf.mxu0
    %v750 = vadd.f32 %v658, %v749
    %v751 = vpop.f32.mrf.mxu0
    %v752 = vadd.f32 %v662, %v751
    %753 = vmatprep.mubr.f32.mxu0 %v371
    %754 = vmatmul.mubr.f32.gmra.mxu0 %v370
    %v755 = vpop.f32.mrf.mxu0
    %v756 = vadd.f32 %v658, %v755
    %v757 = vpop.f32.mrf.mxu0
    %v758 = vadd.f32 %v662, %v757
    %759 = vmatprep.mubr.f32.mxu0 %v375
    %760 = vmatmul.mubr.f32.gmra.mxu0 %v374
    %v761 = vpop.f32.mrf.mxu0
    %v762 = vadd.f32 %v658, %v761
    %v763 = vpop.f32.mrf.mxu0
    %v764 = vadd.f32 %v662, %v763
    %765 = vmatprep.mubr.f32.mxu0 %v379
    %766 = vmatmul.mubr.f32.gmra.mxu0 %v378
    %v767 = vpop.f32.mrf.mxu0
    %v768 = vadd.f32 %v658, %v767
    %v769 = vpop.f32.mrf.mxu0
    %v770 = vadd.f32 %v662, %v769
    %771 = vmatprep.mubr.f32.mxu0 %v383
    %772 = vmatmul.mubr.f32.gmra.mxu0 %v382
    %v773 = vpop.f32.mrf.mxu0
    %v774 = vadd.f32 %v658, %v773
    %v775 = vpop.f32.mrf.mxu0
    %v776 = vadd.f32 %v662, %v775
    %777 = vdwg.mxu0
    %v778 = vmax.f32 %v732, 0.0
    %v779 = vmax.f32 %v734, 0.0
    %v780 = vmax.f32 %v738, 0.0
    %v781 = vmax.f32 %v740, 0.0
    %v782 = vmax.f32 %v744, 0.0
    %v783 = vmax.f32 %v746, 0.0
    %v784 = vmax.f32 %v750, 0.0
    %v785 = vmax.f32 %v752, 0.0
    %v786 = vmax.f32 %v756, 0.0
    %v787 = vmax.f32 %v758, 0.0
    %v788 = vmax.f32 %v762, 0.0
    %v789 = vmax.f32 %v764, 0.0
    %v790 = vmax.f32 %v768, 0.0
    %v791 = vmax.f32 %v770, 0.0
    %v792 = vmax.f32 %v774, 0.0
    %v793 = vmax.f32 %v776, 0.0
    %v794 = vld [vmem:[%s7] sm:$0x3]
    %v795 = vld [vmem:[%s8] sm:$0x3]
    %v797 = vlaneseq
    %v798 = vshrl.u32 %v797, 7
    %v799 = vsub.s32 0, %v798
    %v800 = vrot.slane %v794, %v799
    %v801 = vlaneseq
    %v802 = vshrl.u32 %v801, 7
    %v803 = vsub.s32 1, %v802
    %v804 = vrot.slane %v794, %v803
    %v807 = vmul.f32 %v573, %v800
    %v808 = vmul.f32 %v574, %v804
    %v809 = vmul.f32 %v575, %v800
    %v810 = vmul.f32 %v576, %v804
    %v811 = vmul.f32 %v577, %v800
    %v812 = vmul.f32 %v578, %v804
    %v813 = vmul.f32 %v579, %v800
    %v814 = vmul.f32 %v580, %v804
    %v815 = vmul.f32 %v581, %v800
    %v816 = vmul.f32 %v582, %v804
    %v817 = vmul.f32 %v583, %v800
    %v818 = vmul.f32 %v584, %v804
    %v819 = vmul.f32 %v585, %v800
    %v820 = vmul.f32 %v586, %v804
    %v821 = vmul.f32 %v587, %v800
    %v822 = vmul.f32 %v588, %v804
    %v823 = vadd.f32 %v807, %v808
    %824 = vadd.xlane.f32.xlu0 %v823
    %v825 = vpop.xlane.xlu0 %824
    %v826 = vadd.f32 %v809, %v810
    %827 = vadd.xlane.f32.xlu0 %v826
    %v828 = vpop.xlane.xlu0 %827
    %v829 = vadd.f32 %v811, %v812
    %830 = vadd.xlane.f32.xlu0 %v829
    %v831 = vpop.xlane.xlu0 %830
    %v832 = vadd.f32 %v813, %v814
    %833 = vadd.xlane.f32.xlu0 %v832
    %v834 = vpop.xlane.xlu0 %833
    %v835 = vadd.f32 %v815, %v816
    %836 = vadd.xlane.f32.xlu0 %v835
    %v837 = vpop.xlane.xlu0 %836
    %v838 = vadd.f32 %v817, %v818
    %839 = vadd.xlane.f32.xlu0 %v838
    %v840 = vpop.xlane.xlu0 %839
    %v841 = vadd.f32 %v819, %v820
    %842 = vadd.xlane.f32.xlu0 %v841
    %v843 = vpop.xlane.xlu0 %842
    %v844 = vadd.f32 %v821, %v822
    %845 = vadd.xlane.f32.xlu0 %v844
    %v846 = vpop.xlane.xlu0 %845
    %v848 = vlaneseq
    %v849 = vshrl.u32 %v848, 7
    %v850 = vsub.s32 0, %v849
    %v851 = vrot.slane %v795, %v850
    %v852 = vlaneseq
    %v853 = vshrl.u32 %v852, 7
    %v854 = vsub.s32 1, %v853
    %v855 = vrot.slane %v795, %v854
    %v858 = vmul.f32 %v778, %v851
    %v859 = vmul.f32 %v779, %v855
    %v860 = vmul.f32 %v780, %v851
    %v861 = vmul.f32 %v781, %v855
    %v862 = vmul.f32 %v782, %v851
    %v863 = vmul.f32 %v783, %v855
    %v864 = vmul.f32 %v784, %v851
    %v865 = vmul.f32 %v785, %v855
    %v866 = vmul.f32 %v786, %v851
    %v867 = vmul.f32 %v787, %v855
    %v868 = vmul.f32 %v788, %v851
    %v869 = vmul.f32 %v789, %v855
    %v870 = vmul.f32 %v790, %v851
    %v871 = vmul.f32 %v791, %v855
    %v872 = vmul.f32 %v792, %v851
    %v873 = vmul.f32 %v793, %v855
    %v874 = vadd.f32 %v858, %v859
    %875 = vadd.xlane.f32.xlu0 %v874
    %v876 = vpop.xlane.xlu0 %875
    %v877 = vadd.f32 %v860, %v861
    %878 = vadd.xlane.f32.xlu0 %v877
    %v879 = vpop.xlane.xlu0 %878
    %v880 = vadd.f32 %v862, %v863
    %881 = vadd.xlane.f32.xlu0 %v880
    %v882 = vpop.xlane.xlu0 %881
    %v883 = vadd.f32 %v864, %v865
    %884 = vadd.xlane.f32.xlu0 %v883
    %v885 = vpop.xlane.xlu0 %884
    %v886 = vadd.f32 %v866, %v867
    %887 = vadd.xlane.f32.xlu0 %v886
    %v888 = vpop.xlane.xlu0 %887
    %v889 = vadd.f32 %v868, %v869
    %890 = vadd.xlane.f32.xlu0 %v889
    %v891 = vpop.xlane.xlu0 %890
    %v892 = vadd.f32 %v870, %v871
    %893 = vadd.xlane.f32.xlu0 %v892
    %v894 = vpop.xlane.xlu0 %893
    %v895 = vadd.f32 %v872, %v873
    %896 = vadd.xlane.f32.xlu0 %v895
    %v897 = vpop.xlane.xlu0 %896
    %v898 = vlaneseq
    %v899 = vand.u32 %v898, 127
    %vm900 = vcmp.eq.s32.totalorder %v899, 0
    %v901 = vsel %vm900, %v825, %v876
    %v902 = vsel %vm900, %v828, %v879
    %v903 = vsel %vm900, %v831, %v882
    %v904 = vsel %vm900, %v834, %v885
    %v905 = vsel %vm900, %v837, %v888
    %v906 = vsel %vm900, %v840, %v891
    %v907 = vsel %vm900, %v843, %v894
    %v908 = vsel %vm900, %v846, %v897
    %v909 = vld [vmem:[%s9] sm:$0x1]
    %v911 = vlaneseq
    %v912 = vshrl.u32 %v911, 7
    %v913 = vsub.s32 0, %v912
    %v914 = vrot.slane %v909, %v913
    %v916 = vadd.f32 %v901, %v914
    %v917 = vadd.f32 %v902, %v914
    %v918 = vadd.f32 %v903, %v914
    %v919 = vadd.f32 %v904, %v914
    %v920 = vadd.f32 %v905, %v914
    %v921 = vadd.f32 %v906, %v914
    %v922 = vadd.f32 %v907, %v914
    %v923 = vadd.f32 %v908, %v914
    %vm924 = vcmask 15360
    %925 = vst.msk [vmem:[%s10] sm:$0xff] %vm924, %v916
    %926 = vst.msk [vmem:[%s10 + $0x8] sm:$0xff] %vm924, %v917
    %927 = vst.msk [vmem:[%s10 + $0x10] sm:$0xff] %vm924, %v918
    %928 = vst.msk [vmem:[%s10 + $0x18] sm:$0xff] %vm924, %v919
    %929 = vst.msk [vmem:[%s10 + $0x20] sm:$0xff] %vm924, %v920
    %930 = vst.msk [vmem:[%s10 + $0x28] sm:$0xff] %vm924, %v921
    %931 = vst.msk [vmem:[%s10 + $0x30] sm:$0xff] %vm924, %v922
    %932 = vst.msk [vmem:[%s10 + $0x38] sm:$0xff] %vm924, %v923
    // Predicated region
    $region50: #{tpu_custom_call.1} parent=1 // pred_check
      _
    $region51: #{tpu_custom_call.1} parent=1 // pred_check_branch
      %934 = sbr.rel (0) target = $region53
    $region52: #{tpu_custom_call.1} parent=1 // pred_region
      _
    $region53: #{tpu_custom_call.1} parent=1 // pred_fallthru
      _
    // Predicated region
    $region54: #{tpu_custom_call.1} parent=1 // pred_check
      _
    $region55: #{tpu_custom_call.1} parent=1 // pred_check_branch
      %936 = sbr.rel (0) target = $region57
    $region56: #{tpu_custom_call.1} parent=1 // pred_region
      _
    $region57: #{tpu_custom_call.1} parent=1 // pred_fallthru
      _
    %937 = vsyncpa [#allocation3], 1
    %938 = vsyncpa [#allocation5], 1

// kernel: tpu_custom_call.1
$region0: #{tpu_custom_call.1}
  #allocation0 [shape = 'u32[]', space=smem, size = 0x4, offset = 0x4, fixed_abs, tag = 'smem constant byte address 0x4 - core index']
  #allocation1 [shape = 'u32[144,128]{1,0:T(1,128)}', space=vmem, size = 0x12000, scoped, tag = 'internal scratch']
  %s0 = inlined_call_operand.vmem [shape: f32[64,16], index: 0, kind: input, shape index: {}]
  %s1 = inlined_call_operand.vmem [shape: f32[16,512], index: 1, kind: input, shape index: {}]
  %s2 = inlined_call_operand.vmem [shape: f32[1,512], index: 2, kind: input, shape index: {}]
  %s3 = inlined_call_operand.hbm [shape: f32[256,256], index: 3, kind: input, shape index: {}]
  %s4 = inlined_call_operand.vmem [shape: f32[1,256], index: 4, kind: input, shape index: {}]
  %s5 = inlined_call_operand.hbm [shape: f32[256,256], index: 5, kind: input, shape index: {}]
  %s6 = inlined_call_operand.vmem [shape: f32[1,256], index: 6, kind: input, shape index: {}]
  %s7 = inlined_call_operand.vmem [shape: f32[1,256], index: 7, kind: input, shape index: {}]
  %s8 = inlined_call_operand.vmem [shape: f32[1,256], index: 8, kind: input, shape index: {}]
  %s9 = inlined_call_operand.vmem [shape: f32[1,2], index: 9, kind: input, shape index: {}]
  %s10 = inlined_call_operand.vmem [shape: f32[64,2], index: 10, kind: output, shape index: {}]
  %s11 = sld [smem:[#allocation0]]
  $region58: #{tpu_custom_call.1} parent=0
    _
  %s13 = ssub.s32 1, %s11
  %s14 = scalar_select 0, %s13, %s11
  $region1: #{tpu_custom_call.1} parent=0
    #allocation2 [shape = 'u8[262144]{0}', space=vmem, size = 0x40000, scoped, tag = 'input window, operand 3, single buffered']
    #allocation3 [shape = 's32[1]{0}', space=sflag, size = 0x4, scoped, tag = 'scoped memory for tpu_custom_call.1']
    #allocation4 [shape = 'u8[262144]{0}', space=vmem, size = 0x40000, scoped, tag = 'input window, operand 5, single buffered']
    #allocation5 [shape = 's32[1]{0}', space=sflag, size = 0x4, scoped, tag = 'scoped memory for tpu_custom_call.1']
    %15 = vsyncpa [#allocation3], 0
    %16 = vsyncpa [#allocation5], 0
    // Predicated region
    $region2: #{tpu_custom_call.1} parent=1 // pred_check
      _
    $region3: #{tpu_custom_call.1} parent=1 // pred_check_branch
      %18 = sbr.rel (0) target = $region5
    $region4: #{tpu_custom_call.1} parent=1 // pred_region
      _
    $region5: #{tpu_custom_call.1} parent=1 // pred_fallthru
      _
    // Predicated region
    $region6: #{tpu_custom_call.1} parent=1 // pred_check
      _
    $region7: #{tpu_custom_call.1} parent=1 // pred_check_branch
      %20 = sbr.rel (0) target = $region9
    $region8: #{tpu_custom_call.1} parent=1 // pred_region
      _
    $region9: #{tpu_custom_call.1} parent=1 // pred_fallthru
      _
    // Predicated region
    $region10: #{tpu_custom_call.1} parent=1 // pred_check
      _
    $region11: #{tpu_custom_call.1} parent=1 // pred_check_branch
      %22 = sbr.rel (0) target = $region13
    $region12: #{tpu_custom_call.1} parent=1 // pred_region
      _
    $region13: #{tpu_custom_call.1} parent=1 // pred_fallthru
      _
    // Predicated region
    $region14: #{tpu_custom_call.1} parent=1 // pred_check
      _
    $region15: #{tpu_custom_call.1} parent=1 // pred_check_branch
      %24 = sbr.rel (0) target = $region17
    $region16: #{tpu_custom_call.1} parent=1 // pred_region
      %s26 = ssub.s32 8192, 8192
      %27 = vsyncadd [#allocation3], %s26
      %s28 = sshll.u32 [#allocation2], 4
      %s29 = int_to_ptr.vmem [resolvable:$true] %s28
      %34 = dma.hbm_to_vmem [thread:$0]  %s3, 8192, %s29, [#allocation3], 256, 256, 16
    $region17: #{tpu_custom_call.1} parent=1 // pred_fallthru
      _
    // Predicated region
    $region18: #{tpu_custom_call.1} parent=1 // pred_check
      _
    $region19: #{tpu_custom_call.1} parent=1 // pred_check_branch
      %36 = sbr.rel (0) target = $region21
    $region20: #{tpu_custom_call.1} parent=1 // pred_region
      _
    $region21: #{tpu_custom_call.1} parent=1 // pred_fallthru
      _
    // Predicated region
    $region22: #{tpu_custom_call.1} parent=1 // pred_check
      _
    $region23: #{tpu_custom_call.1} parent=1 // pred_check_branch
      %38 = sbr.rel (0) target = $region25
    $region24: #{tpu_custom_call.1} parent=1 // pred_region
      %s40 = ssub.s32 8192, 8192
      %41 = vsyncadd [#allocation5], %s40
      %s42 = sshll.u32 [#allocation4], 4
      %s43 = int_to_ptr.vmem [resolvable:$true] %s42
      %48 = dma.hbm_to_vmem [thread:$0]  %s5, 8192, %s43, [#allocation5], 256, 256, 16
    $region25: #{tpu_custom_call.1} parent=1 // pred_fallthru
      _
    // Predicated region
    $region26: #{tpu_custom_call.1} parent=1 // pred_check
      _
    $region27: #{tpu_custom_call.1} parent=1 // pred_check_branch
      %50 = sbr.rel (0) target = $region29
    $region28: #{tpu_custom_call.1} parent=1 // pred_region
      _
    $region29: #{tpu_custom_call.1} parent=1 // pred_fallthru
      _
    // Predicated region
    $region30: #{tpu_custom_call.1} parent=1 // pred_check
      _
    $region31: #{tpu_custom_call.1} parent=1 // pred_check_branch
      %52 = sbr.rel (0) target = $region33
    $region32: #{tpu_custom_call.1} parent=1 // pred_region
      _
    $region33: #{tpu_custom_call.1} parent=1 // pred_fallthru
      _
    // Predicated region
    $region34: #{tpu_custom_call.1} parent=1 // pred_check
      _
    $region35: #{tpu_custom_call.1} parent=1 // pred_check_branch
      %54 = sbr.rel (0) target = $region37
    $region36: #{tpu_custom_call.1} parent=1 // pred_region
      _
    $region37: #{tpu_custom_call.1} parent=1 // pred_fallthru
      _
    // Predicated region
    $region38: #{tpu_custom_call.1} parent=1 // pred_check
      _
    $region39: #{tpu_custom_call.1} parent=1 // pred_check_branch
      %56 = sbr.rel (0) target = $region41
    $region40: #{tpu_custom_call.1} parent=1 // pred_region
      _
    $region41: #{tpu_custom_call.1} parent=1 // pred_fallthru
      _
    // Predicated region
    $region42: #{tpu_custom_call.1} parent=1 // pred_check
      _
    $region43: #{tpu_custom_call.1} parent=1 // pred_check_branch
      %58 = sbr.rel (0) target = $region45
    $region44: #{tpu_custom_call.1} parent=1 // pred_region
      %59 = dma.done [#allocation3], 8192
    $region45: #{tpu_custom_call.1} parent=1 // pred_fallthru
      _
    // Predicated region
    $region46: #{tpu_custom_call.1} parent=1 // pred_check
      _
    $region47: #{tpu_custom_call.1} parent=1 // pred_check_branch
      %61 = sbr.rel (0) target = $region49
    $region48: #{tpu_custom_call.1} parent=1 // pred_region
      %62 = dma.done [#allocation5], 8192
    $region49: #{tpu_custom_call.1} parent=1 // pred_fallthru
      _
    %v63 = vld [vmem:[%s0] sm:$0xff]
    %v64 = vld [vmem:[%s0 + $0x8] sm:$0xff]
    %v65 = vld [vmem:[%s0 + $0x10] sm:$0xff]
    %v66 = vld [vmem:[%s0 + $0x18] sm:$0xff]
    %v67 = vld [vmem:[%s0 + $0x20] sm:$0xff]
    %v68 = vld [vmem:[%s0 + $0x28] sm:$0xff]
    %v69 = vld [vmem:[%s0 + $0x30] sm:$0xff]
    %v70 = vld [vmem:[%s0 + $0x38] sm:$0xff]
    %v71 = vld [vmem:[%s1] sm:$0xff]
    %v72 = vld [vmem:[%s1 + $0x8] sm:$0xff]
    %v73 = vld [vmem:[%s1 + $0x10] sm:$0xff]
    %v74 = vld [vmem:[%s1 + $0x18] sm:$0xff]
    %v75 = vld [vmem:[%s1 + $0x20] sm:$0xff]
    %v76 = vld [vmem:[%s1 + $0x28] sm:$0xff]
    %v77 = vld [vmem:[%s1 + $0x30] sm:$0xff]
    %v78 = vld [vmem:[%s1 + $0x38] sm:$0xff]
    %v79 = vld [vmem:[%s2] sm:$0xf]
    %v81 = vlaneseq
    %v82 = vshrl.u32 %v81, 7
    %v83 = vsub.s32 0, %v82
    %v84 = vrot.slane %v79, %v83
    %v85 = vlaneseq
    %v86 = vshrl.u32 %v85, 7
    %v87 = vsub.s32 1, %v86
    %v88 = vrot.slane %v79, %v87
    %v89 = vlaneseq
    %v90 = vshrl.u32 %v89, 7
    %v91 = vsub.s32 2, %v90
    %v92 = vrot.slane %v79, %v91
    %v93 = vlaneseq
    %v94 = vshrl.u32 %v93, 7
    %v95 = vsub.s32 3, %v94
    %v96 = vrot.slane %v79, %v95
    %vm101 = vcmask 130048
    %v103 = vsel %vm101, %v63, 0
    %v106 = vsel %vm101, %v64, 0
    %v109 = vsel %vm101, %v65, 0
    %v112 = vsel %vm101, %v66, 0
    %v115 = vsel %vm101, %v67, 0
    %v118 = vsel %vm101, %v68, 0
    %v121 = vsel %vm101, %v69, 0
    %v124 = vsel %vm101, %v70, 0
    %126 = vmatprep.subr.mxu0 0.0
    %127 = vmatpush1.msra.mxu0 0.0
    %128 = vmatprep.subr.mxu0 0.0
    %129 = vmatpush1.msra.mxu0 0.0
    %130 = vmatprep.subr.mxu0 0.0
    %131 = vmatpush1.msra.mxu0 0.0
    %132 = vmatprep.subr.mxu0 0.0
    %133 = vmatpush1.msra.mxu0 0.0
    %134 = vmatprep.subr.mxu0 0.0
    %135 = vmatpush1.msra.mxu0 0.0
    %136 = vmatprep.subr.mxu0 0.0
    %137 = vmatpush1.msra.mxu0 0.0
    %138 = vmatprep.subr.mxu0 0.0
    %139 = vmatpush1.msra.mxu0 0.0
    %140 = vmatprep.subr.mxu0 0.0
    %141 = vmatpush1.msra.mxu0 0.0
    %142 = vmatprep.subr.mxu0 0.0
    %143 = vmatpush1.msra.mxu0 0.0
    %144 = vmatprep.subr.mxu0 0.0
    %145 = vmatpush1.msra.mxu0 0.0
    %146 = vmatprep.subr.mxu0 0.0
    %147 = vmatpush1.msra.mxu0 0.0
    %148 = vmatprep.subr.mxu0 0.0
    %149 = vmatpush1.msra.mxu0 0.0
    %150 = vmatprep.subr.mxu0 0.0
    %151 = vmatpush1.msra.mxu0 0.0
    %152 = vmatprep.subr.mxu0 0.0
    %153 = vmatpush1.msra.mxu0 0.0
    %154 = vmatprep.subr.mxu0 %v76
    %155 = vmatpush1.msra.mxu0 %v75
    %156 = vmatprep.subr.mxu0 %v72
    %157 = vmatpush1.msra.mxu0 %v71
    %158 = vmatprep.subr.mxu0 0.0
    %159 = vmatpush2.msra.mxu0 0.0
    %160 = vmatprep.subr.mxu0 0.0
    %161 = vmatpush2.msra.mxu0 0.0
    %162 = vmatprep.subr.mxu0 0.0
    %163 = vmatpush2.msra.mxu0 0.0
    %164 = vmatprep.subr.mxu0 0.0
    %165 = vmatpush2.msra.mxu0 0.0
    %166 = vmatprep.subr.mxu0 0.0
    %167 = vmatpush2.msra.mxu0 0.0
    %168 = vmatprep.subr.mxu0 0.0
    %169 = vmatpush2.msra.mxu0 0.0
    %170 = vmatprep.subr.mxu0 0.0
    %171 = vmatpush2.msra.mxu0 0.0
    %172 = vmatprep.subr.mxu0 0.0
    %173 = vmatpush2.msra.mxu0 0.0
    %174 = vmatprep.subr.mxu0 0.0
    %175 = vmatpush2.msra.mxu0 0.0
    %176 = vmatprep.subr.mxu0 0.0
    %177 = vmatpush2.msra.mxu0 0.0
    %178 = vmatprep.subr.mxu0 0.0
    %179 = vmatpush2.msra.mxu0 0.0
    %180 = vmatprep.subr.mxu0 0.0
    %181 = vmatpush2.msra.mxu0 0.0
    %182 = vmatprep.subr.mxu0 0.0
    %183 = vmatpush2.msra.mxu0 0.0
    %184 = vmatprep.subr.mxu0 0.0
    %185 = vmatpush2.msra.mxu0 0.0
    %186 = vmatprep.subr.mxu0 0.0
    %187 = vmatpush2.msra.mxu0 0.0
    %188 = vmatprep.subr.mxu0 0.0
    %189 = vmatpush2.msra.mxu0 0.0
    %190 = vmatprep.mubr.f32.mxu0 0.0
    %191 = vmatmul.mubr.f32.gmra.mxu0 %v103
    %v192 = vpop.f32.mrf.mxu0
    %v193 = vadd.f32 %v84, %v192
    %v194 = vpop.f32.mrf.mxu0
    %v195 = vadd.f32 %v88, %v194
    %196 = vmatprep.mubr.f32.mxu0 0.0
    %197 = vmatmul.mubr.f32.gmra.mxu0 %v106
    %v198 = vpop.f32.mrf.mxu0
    %v199 = vadd.f32 %v84, %v198
    %v200 = vpop.f32.mrf.mxu0
    %v201 = vadd.f32 %v88, %v200
    %202 = vmatprep.mubr.f32.mxu0 0.0
    %203 = vmatmul.mubr.f32.gmra.mxu0 %v109
    %v204 = vpop.f32.mrf.mxu0
    %v205 = vadd.f32 %v84, %v204
    %v206 = vpop.f32.mrf.mxu0
    %v207 = vadd.f32 %v88, %v206
    %208 = vmatprep.mubr.f32.mxu0 0.0
    %209 = vmatmul.mubr.f32.gmra.mxu0 %v112
    %v210 = vpop.f32.mrf.mxu0
    %v211 = vadd.f32 %v84, %v210
    %v212 = vpop.f32.mrf.mxu0
    %v213 = vadd.f32 %v88, %v212
    %214 = vmatprep.mubr.f32.mxu0 0.0
    %215 = vmatmul.mubr.f32.gmra.mxu0 %v115
    %v216 = vpop.f32.mrf.mxu0
    %v217 = vadd.f32 %v84, %v216
    %v218 = vpop.f32.mrf.mxu0
    %v219 = vadd.f32 %v88, %v218
    %220 = vmatprep.mubr.f32.mxu0 0.0
    %221 = vmatmul.mubr.f32.gmra.mxu0 %v118
    %v222 = vpop.f32.mrf.mxu0
    %v223 = vadd.f32 %v84, %v222
    %v224 = vpop.f32.mrf.mxu0
    %v225 = vadd.f32 %v88, %v224
    %226 = vmatprep.mubr.f32.mxu0 0.0
    %227 = vmatmul.mubr.f32.gmra.mxu0 %v121
    %v228 = vpop.f32.mrf.mxu0
    %v229 = vadd.f32 %v84, %v228
    %v230 = vpop.f32.mrf.mxu0
    %v231 = vadd.f32 %v88, %v230
    %232 = vmatprep.mubr.f32.mxu0 0.0
    %233 = vmatmul.mubr.f32.gmra.mxu0 %v124
    %v234 = vpop.f32.mrf.mxu0
    %v235 = vadd.f32 %v84, %v234
    %v236 = vpop.f32.mrf.mxu0
    %v237 = vadd.f32 %v88, %v236
    %238 = vdwg.mxu0
    %239 = vmatprep.subr.mxu0 0.0
    %240 = vmatpush1.msra.mxu0 0.0
    %241 = vmatprep.subr.mxu0 0.0
    %242 = vmatpush1.msra.mxu0 0.0
    %243 = vmatprep.subr.mxu0 0.0
    %244 = vmatpush1.msra.mxu0 0.0
    %245 = vmatprep.subr.mxu0 0.0
    %246 = vmatpush1.msra.mxu0 0.0
    %247 = vmatprep.subr.mxu0 0.0
    %248 = vmatpush1.msra.mxu0 0.0
    %249 = vmatprep.subr.mxu0 0.0
    %250 = vmatpush1.msra.mxu0 0.0
    %251 = vmatprep.subr.mxu0 0.0
    %252 = vmatpush1.msra.mxu0 0.0
    %253 = vmatprep.subr.mxu0 0.0
    %254 = vmatpush1.msra.mxu0 0.0
    %255 = vmatprep.subr.mxu0 0.0
    %256 = vmatpush1.msra.mxu0 0.0
    %257 = vmatprep.subr.mxu0 0.0
    %258 = vmatpush1.msra.mxu0 0.0
    %259 = vmatprep.subr.mxu0 0.0
    %260 = vmatpush1.msra.mxu0 0.0
    %261 = vmatprep.subr.mxu0 0.0
    %262 = vmatpush1.msra.mxu0 0.0
    %263 = vmatprep.subr.mxu0 0.0
    %264 = vmatpush1.msra.mxu0 0.0
    %265 = vmatprep.subr.mxu0 0.0
    %266 = vmatpush1.msra.mxu0 0.0
    %267 = vmatprep.subr.mxu0 %v78
    %268 = vmatpush1.msra.mxu0 %v77
    %269 = vmatprep.subr.mxu0 %v74
    %270 = vmatpush1.msra.mxu0 %v73
    %271 = vmatprep.subr.mxu0 0.0
    %272 = vmatpush2.msra.mxu0 0.0
    %273 = vmatprep.subr.mxu0 0.0
    %274 = vmatpush2.msra.mxu0 0.0
    %275 = vmatprep.subr.mxu0 0.0
    %276 = vmatpush2.msra.mxu0 0.0
    %277 = vmatprep.subr.mxu0 0.0
    %278 = vmatpush2.msra.mxu0 0.0
    %279 = vmatprep.subr.mxu0 0.0
    %280 = vmatpush2.msra.mxu0 0.0
    %281 = vmatprep.subr.mxu0 0.0
    %282 = vmatpush2.msra.mxu0 0.0
    %283 = vmatprep.subr.mxu0 0.0
    %284 = vmatpush2.msra.mxu0 0.0
    %285 = vmatprep.subr.mxu0 0.0
    %286 = vmatpush2.msra.mxu0 0.0
    %287 = vmatprep.subr.mxu0 0.0
    %288 = vmatpush2.msra.mxu0 0.0
    %289 = vmatprep.subr.mxu0 0.0
    %290 = vmatpush2.msra.mxu0 0.0
    %291 = vmatprep.subr.mxu0 0.0
    %292 = vmatpush2.msra.mxu0 0.0
    %293 = vmatprep.subr.mxu0 0.0
    %294 = vmatpush2.msra.mxu0 0.0
    %295 = vmatprep.subr.mxu0 0.0
    %296 = vmatpush2.msra.mxu0 0.0
    %297 = vmatprep.subr.mxu0 0.0
    %298 = vmatpush2.msra.mxu0 0.0
    %299 = vmatprep.subr.mxu0 0.0
    %300 = vmatpush2.msra.mxu0 0.0
    %301 = vmatprep.subr.mxu0 0.0
    %302 = vmatpush2.msra.mxu0 0.0
    %303 = vmatprep.mubr.f32.mxu0 0.0
    %304 = vmatmul.mubr.f32.gmra.mxu0 %v103
    %v305 = vpop.f32.mrf.mxu0
    %v306 = vadd.f32 %v92, %v305
    %v307 = vpop.f32.mrf.mxu0
    %v308 = vadd.f32 %v96, %v307
    %309 = vmatprep.mubr.f32.mxu0 0.0
    %310 = vmatmul.mubr.f32.gmra.mxu0 %v106
    %v311 = vpop.f32.mrf.mxu0
    %v312 = vadd.f32 %v92, %v311
    %v313 = vpop.f32.mrf.mxu0
    %v314 = vadd.f32 %v96, %v313
    %315 = vmatprep.mubr.f32.mxu0 0.0
    %316 = vmatmul.mubr.f32.gmra.mxu0 %v109
    %v317 = vpop.f32.mrf.mxu0
    %v318 = vadd.f32 %v92, %v317
    %v319 = vpop.f32.mrf.mxu0
    %v320 = vadd.f32 %v96, %v319
    %321 = vmatprep.mubr.f32.mxu0 0.0
    %322 = vmatmul.mubr.f32.gmra.mxu0 %v112
    %v323 = vpop.f32.mrf.mxu0
    %v324 = vadd.f32 %v92, %v323
    %v325 = vpop.f32.mrf.mxu0
    %v326 = vadd.f32 %v96, %v325
    %327 = vmatprep.mubr.f32.mxu0 0.0
    %328 = vmatmul.mubr.f32.gmra.mxu0 %v115
    %v329 = vpop.f32.mrf.mxu0
    %v330 = vadd.f32 %v92, %v329
    %v331 = vpop.f32.mrf.mxu0
    %v332 = vadd.f32 %v96, %v331
    %333 = vmatprep.mubr.f32.mxu0 0.0
    %334 = vmatmul.mubr.f32.gmra.mxu0 %v118
    %v335 = vpop.f32.mrf.mxu0
    %v336 = vadd.f32 %v92, %v335
    %v337 = vpop.f32.mrf.mxu0
    %v338 = vadd.f32 %v96, %v337
    %339 = vmatprep.mubr.f32.mxu0 0.0
    %340 = vmatmul.mubr.f32.gmra.mxu0 %v121
    %v341 = vpop.f32.mrf.mxu0
    %v342 = vadd.f32 %v92, %v341
    %v343 = vpop.f32.mrf.mxu0
    %v344 = vadd.f32 %v96, %v343
    %345 = vmatprep.mubr.f32.mxu0 0.0
    %346 = vmatmul.mubr.f32.gmra.mxu0 %v124
    %v347 = vpop.f32.mrf.mxu0
    %v348 = vadd.f32 %v92, %v347
    %v349 = vpop.f32.mrf.mxu0
    %v350 = vadd.f32 %v96, %v349
    %351 = vdwg.mxu0
    %v352 = vmax.f32 %v193, 0.0
    %v353 = vmax.f32 %v195, 0.0
    %v354 = vmax.f32 %v306, 0.0
    %v355 = vmax.f32 %v308, 0.0
    %v356 = vmax.f32 %v199, 0.0
    %v357 = vmax.f32 %v201, 0.0
    %v358 = vmax.f32 %v312, 0.0
    %v359 = vmax.f32 %v314, 0.0
    %v360 = vmax.f32 %v205, 0.0
    %v361 = vmax.f32 %v207, 0.0
    %v362 = vmax.f32 %v318, 0.0
    %v363 = vmax.f32 %v320, 0.0
    %v364 = vmax.f32 %v211, 0.0
    %v365 = vmax.f32 %v213, 0.0
    %v366 = vmax.f32 %v324, 0.0
    %v367 = vmax.f32 %v326, 0.0
    %v368 = vmax.f32 %v217, 0.0
    %v369 = vmax.f32 %v219, 0.0
    %v370 = vmax.f32 %v330, 0.0
    %v371 = vmax.f32 %v332, 0.0
    %v372 = vmax.f32 %v223, 0.0
    %v373 = vmax.f32 %v225, 0.0
    %v374 = vmax.f32 %v336, 0.0
    %v375 = vmax.f32 %v338, 0.0
    %v376 = vmax.f32 %v229, 0.0
    %v377 = vmax.f32 %v231, 0.0
    %v378 = vmax.f32 %v342, 0.0
    %v379 = vmax.f32 %v344, 0.0
    %v380 = vmax.f32 %v235, 0.0
    %v381 = vmax.f32 %v237, 0.0
    %v382 = vmax.f32 %v348, 0.0
    %v383 = vmax.f32 %v350, 0.0
    %v384 = vld [vmem:[#allocation2] sm:$0xff]
    %v385 = vld [vmem:[#allocation2 + $0x8] sm:$0xff]
    %v386 = vld [vmem:[#allocation2 + $0x10] sm:$0xff]
    %v387 = vld [vmem:[#allocation2 + $0x18] sm:$0xff]
    %v388 = vld [vmem:[#allocation2 + $0x20] sm:$0xff]
    %v389 = vld [vmem:[#allocation2 + $0x28] sm:$0xff]
    %v390 = vld [vmem:[#allocation2 + $0x30] sm:$0xff]
    %v391 = vld [vmem:[#allocation2 + $0x38] sm:$0xff]
    %v392 = vld [vmem:[#allocation2 + $0x40] sm:$0xff]
    %v393 = vld [vmem:[#allocation2 + $0x48] sm:$0xff]
    %v394 = vld [vmem:[#allocation2 + $0x50] sm:$0xff]
    %v395 = vld [vmem:[#allocation2 + $0x58] sm:$0xff]
    %v396 = vld [vmem:[#allocation2 + $0x60] sm:$0xff]
    %v397 = vld [vmem:[#allocation2 + $0x68] sm:$0xff]
    %v398 = vld [vmem:[#allocation2 + $0x70] sm:$0xff]
    %v399 = vld [vmem:[#allocation2 + $0x78] sm:$0xff]
    %v400 = vld [vmem:[#allocation2 + $0x80] sm:$0xff]
    %v401 = vld [vmem:[#allocation2 + $0x88] sm:$0xff]
    %v402 = vld [vmem:[#allocation2 + $0x90] sm:$0xff]
    %v403 = vld [vmem:[#allocation2 + $0x98] sm:$0xff]
    %v404 = vld [vmem:[#allocation2 + $0xa0] sm:$0xff]
    %v405 = vld [vmem:[#allocation2 + $0xa8] sm:$0xff]
    %v406 = vld [vmem:[#allocation2 + $0xb0] sm:$0xff]
    %v407 = vld [vmem:[#allocation2 + $0xb8] sm:$0xff]
    %v408 = vld [vmem:[#allocation2 + $0xc0] sm:$0xff]
    %v409 = vld [vmem:[#allocation2 + $0xc8] sm:$0xff]
    %v410 = vld [vmem:[#allocation2 + $0xd0] sm:$0xff]
    %v411 = vld [vmem:[#allocation2 + $0xd8] sm:$0xff]
    %v412 = vld [vmem:[#allocation2 + $0xe0] sm:$0xff]
    %v413 = vld [vmem:[#allocation2 + $0xe8] sm:$0xff]
    %v414 = vld [vmem:[#allocation2 + $0xf0] sm:$0xff]
    %v415 = vld [vmem:[#allocation2 + $0xf8] sm:$0xff]
    %v416 = vld [vmem:[#allocation2 + $0x100] sm:$0xff]
    %v417 = vld [vmem:[#allocation2 + $0x108] sm:$0xff]
    %v418 = vld [vmem:[#allocation2 + $0x110] sm:$0xff]
    %v419 = vld [vmem:[#allocation2 + $0x118] sm:$0xff]
    %v420 = vld [vmem:[#allocation2 + $0x120] sm:$0xff]
    %v421 = vld [vmem:[#allocation2 + $0x128] sm:$0xff]
    %v422 = vld [vmem:[#allocation2 + $0x130] sm:$0xff]
    %v423 = vld [vmem:[#allocation2 + $0x138] sm:$0xff]
    %v424 = vld [vmem:[#allocation2 + $0x140] sm:$0xff]
    %v425 = vld [vmem:[#allocation2 + $0x148] sm:$0xff]
    %v426 = vld [vmem:[#allocation2 + $0x150] sm:$0xff]
    %v427 = vld [vmem:[#allocation2 + $0x158] sm:$0xff]
    %v428 = vld [vmem:[#allocation2 + $0x160] sm:$0xff]
    %v429 = vld [vmem:[#allocation2 + $0x168] sm:$0xff]
    %v430 = vld [vmem:[#allocation2 + $0x170] sm:$0xff]
    %v431 = vld [vmem:[#allocation2 + $0x178] sm:$0xff]
    %v432 = vld [vmem:[#allocation2 + $0x180] sm:$0xff]
    %v433 = vld [vmem:[#allocation2 + $0x188] sm:$0xff]
    %v434 = vld [vmem:[#allocation2 + $0x190] sm:$0xff]
    %v435 = vld [vmem:[#allocation2 + $0x198] sm:$0xff]
    %v436 = vld [vmem:[#allocation2 + $0x1a0] sm:$0xff]
    %v437 = vld [vmem:[#allocation2 + $0x1a8] sm:$0xff]
    %v438 = vld [vmem:[#allocation2 + $0x1b0] sm:$0xff]
    %v439 = vld [vmem:[#allocation2 + $0x1b8] sm:$0xff]
    %v440 = vld [vmem:[#allocation2 + $0x1c0] sm:$0xff]
    %v441 = vld [vmem:[#allocation2 + $0x1c8] sm:$0xff]
    %v442 = vld [vmem:[#allocation2 + $0x1d0] sm:$0xff]
    %v443 = vld [vmem:[#allocation2 + $0x1d8] sm:$0xff]
    %v444 = vld [vmem:[#allocation2 + $0x1e0] sm:$0xff]
    %v445 = vld [vmem:[#allocation2 + $0x1e8] sm:$0xff]
    %v446 = vld [vmem:[#allocation2 + $0x1f0] sm:$0xff]
    %v447 = vld [vmem:[#allocation2 + $0x1f8] sm:$0xff]
    %v448 = vld [vmem:[%s4] sm:$0x3]
    %v450 = vlaneseq
    %v451 = vshrl.u32 %v450, 7
    %v452 = vsub.s32 0, %v451
    %v453 = vrot.slane %v448, %v452
    %v454 = vlaneseq
    %v455 = vshrl.u32 %v454, 7
    %v456 = vsub.s32 1, %v455
    %v457 = vrot.slane %v448, %v456
    %460 = vmatprep.subr.mxu0 %v415
    %461 = vmatpush1.msra.mxu0 %v414
    %462 = vmatprep.subr.mxu0 %v413
    %463 = vmatpush1.msra.mxu0 %v412
    %464 = vmatprep.subr.mxu0 %v411
    %465 = vmatpush1.msra.mxu0 %v410
    %466 = vmatprep.subr.mxu0 %v409
    %467 = vmatpush1.msra.mxu0 %v408
    %468 = vmatprep.subr.mxu0 %v407
    %469 = vmatpush1.msra.mxu0 %v406
    %470 = vmatprep.subr.mxu0 %v405
    %471 = vmatpush1.msra.mxu0 %v404
    %472 = vmatprep.subr.mxu0 %v403
    %473 = vmatpush1.msra.mxu0 %v402
    %474 = vmatprep.subr.mxu0 %v401
    %475 = vmatpush1.msra.mxu0 %v400
    %476 = vmatprep.subr.mxu0 %v399
    %477 = vmatpush1.msra.mxu0 %v398
    %478 = vmatprep.subr.mxu0 %v397
    %479 = vmatpush1.msra.mxu0 %v396
    %480 = vmatprep.subr.mxu0 %v395
    %481 = vmatpush1.msra.mxu0 %v394
    %482 = vmatprep.subr.mxu0 %v393
    %483 = vmatpush1.msra.mxu0 %v392
    %484 = vmatprep.subr.mxu0 %v391
    %485 = vmatpush1.msra.mxu0 %v390
    %486 = vmatprep.subr.mxu0 %v389
    %487 = vmatpush1.msra.mxu0 %v388
    %488 = vmatprep.subr.mxu0 %v387
    %489 = vmatpush1.msra.mxu0 %v386
    %490 = vmatprep.subr.mxu0 %v385
    %491 = vmatpush1.msra.mxu0 %v384
    %492 = vmatprep.subr.mxu0 %v447
    %493 = vmatpush2.msra.mxu0 %v446
    %494 = vmatprep.subr.mxu0 %v445
    %495 = vmatpush2.msra.mxu0 %v444
    %496 = vmatprep.subr.mxu0 %v443
    %497 = vmatpush2.msra.mxu0 %v442
    %498 = vmatprep.subr.mxu0 %v441
    %499 = vmatpush2.msra.mxu0 %v440
    %500 = vmatprep.subr.mxu0 %v439
    %501 = vmatpush2.msra.mxu0 %v438
    %502 = vmatprep.subr.mxu0 %v437
    %503 = vmatpush2.msra.mxu0 %v436
    %504 = vmatprep.subr.mxu0 %v435
    %505 = vmatpush2.msra.mxu0 %v434
    %506 = vmatprep.subr.mxu0 %v433
    %507 = vmatpush2.msra.mxu0 %v432
    %508 = vmatprep.subr.mxu0 %v431
    %509 = vmatpush2.msra.mxu0 %v430
    %510 = vmatprep.subr.mxu0 %v429
    %511 = vmatpush2.msra.mxu0 %v428
    %512 = vmatprep.subr.mxu0 %v427
    %513 = vmatpush2.msra.mxu0 %v426
    %514 = vmatprep.subr.mxu0 %v425
    %515 = vmatpush2.msra.mxu0 %v424
    %516 = vmatprep.subr.mxu0 %v423
    %517 = vmatpush2.msra.mxu0 %v422
    %518 = vmatprep.subr.mxu0 %v421
    %519 = vmatpush2.msra.mxu0 %v420
    %520 = vmatprep.subr.mxu0 %v419
    %521 = vmatpush2.msra.mxu0 %v418
    %522 = vmatprep.subr.mxu0 %v417
    %523 = vmatpush2.msra.mxu0 %v416
    %524 = vmatprep.mubr.f32.mxu0 %v353
    %525 = vmatmul.mubr.f32.gmra.mxu0 %v352
    %v526 = vpop.f32.mrf.mxu0
    %v527 = vadd.f32 %v453, %v526
    %v528 = vpop.f32.mrf.mxu0
    %v529 = vadd.f32 %v457, %v528
    %530 = vmatprep.mubr.f32.mxu0 %v357
    %531 = vmatmul.mubr.f32.gmra.mxu0 %v356
    %v532 = vpop.f32.mrf.mxu0
    %v533 = vadd.f32 %v453, %v532
    %v534 = vpop.f32.mrf.mxu0
    %v535 = vadd.f32 %v457, %v534
    %536 = vmatprep.mubr.f32.mxu0 %v361
    %537 = vmatmul.mubr.f32.gmra.mxu0 %v360
    %v538 = vpop.f32.mrf.mxu0
    %v539 = vadd.f32 %v453, %v538
    %v540 = vpop.f32.mrf.mxu0
    %v541 = vadd.f32 %v457, %v540
    %542 = vmatprep.mubr.f32.mxu0 %v365
    %543 = vmatmul.mubr.f32.gmra.mxu0 %v364
    %v544 = vpop.f32.mrf.mxu0
    %v545 = vadd.f32 %v453, %v544
    %v546 = vpop.f32.mrf.mxu0
    %v547 = vadd.f32 %v457, %v546
    %548 = vmatprep.mubr.f32.mxu0 %v369
    %549 = vmatmul.mubr.f32.gmra.mxu0 %v368
    %v550 = vpop.f32.mrf.mxu0
    %v551 = vadd.f32 %v453, %v550
    %v552 = vpop.f32.mrf.mxu0
    %v553 = vadd.f32 %v457, %v552
    %554 = vmatprep.mubr.f32.mxu0 %v373
    %555 = vmatmul.mubr.f32.gmra.mxu0 %v372
    %v556 = vpop.f32.mrf.mxu0
    %v557 = vadd.f32 %v453, %v556
    %v558 = vpop.f32.mrf.mxu0
    %v559 = vadd.f32 %v457, %v558
    %560 = vmatprep.mubr.f32.mxu0 %v377
    %561 = vmatmul.mubr.f32.gmra.mxu0 %v376
    %v562 = vpop.f32.mrf.mxu0
    %v563 = vadd.f32 %v453, %v562
    %v564 = vpop.f32.mrf.mxu0
    %v565 = vadd.f32 %v457, %v564
    %566 = vmatprep.mubr.f32.mxu0 %v381
    %567 = vmatmul.mubr.f32.gmra.mxu0 %v380
    %v568 = vpop.f32.mrf.mxu0
    %v569 = vadd.f32 %v453, %v568
    %v570 = vpop.f32.mrf.mxu0
    %v571 = vadd.f32 %v457, %v570
    %572 = vdwg.mxu0
    %v573 = vmax.f32 %v527, 0.0
    %v574 = vmax.f32 %v529, 0.0
    %v575 = vmax.f32 %v533, 0.0
    %v576 = vmax.f32 %v535, 0.0
    %v577 = vmax.f32 %v539, 0.0
    %v578 = vmax.f32 %v541, 0.0
    %v579 = vmax.f32 %v545, 0.0
    %v580 = vmax.f32 %v547, 0.0
    %v581 = vmax.f32 %v551, 0.0
    %v582 = vmax.f32 %v553, 0.0
    %v583 = vmax.f32 %v557, 0.0
    %v584 = vmax.f32 %v559, 0.0
    %v585 = vmax.f32 %v563, 0.0
    %v586 = vmax.f32 %v565, 0.0
    %v587 = vmax.f32 %v569, 0.0
    %v588 = vmax.f32 %v571, 0.0
    %v589 = vld [vmem:[#allocation4] sm:$0xff]
    %v590 = vld [vmem:[#allocation4 + $0x8] sm:$0xff]
    %v591 = vld [vmem:[#allocation4 + $0x10] sm:$0xff]
    %v592 = vld [vmem:[#allocation4 + $0x18] sm:$0xff]
    %v593 = vld [vmem:[#allocation4 + $0x20] sm:$0xff]
    %v594 = vld [vmem:[#allocation4 + $0x28] sm:$0xff]
    %v595 = vld [vmem:[#allocation4 + $0x30] sm:$0xff]
    %v596 = vld [vmem:[#allocation4 + $0x38] sm:$0xff]
    %v597 = vld [vmem:[#allocation4 + $0x40] sm:$0xff]
    %v598 = vld [vmem:[#allocation4 + $0x48] sm:$0xff]
    %v599 = vld [vmem:[#allocation4 + $0x50] sm:$0xff]
    %v600 = vld [vmem:[#allocation4 + $0x58] sm:$0xff]
    %v601 = vld [vmem:[#allocation4 + $0x60] sm:$0xff]
    %v602 = vld [vmem:[#allocation4 + $0x68] sm:$0xff]
    %v603 = vld [vmem:[#allocation4 + $0x70] sm:$0xff]
    %v604 = vld [vmem:[#allocation4 + $0x78] sm:$0xff]
    %v605 = vld [vmem:[#allocation4 + $0x80] sm:$0xff]
    %v606 = vld [vmem:[#allocation4 + $0x88] sm:$0xff]
    %v607 = vld [vmem:[#allocation4 + $0x90] sm:$0xff]
    %v608 = vld [vmem:[#allocation4 + $0x98] sm:$0xff]
    %v609 = vld [vmem:[#allocation4 + $0xa0] sm:$0xff]
    %v610 = vld [vmem:[#allocation4 + $0xa8] sm:$0xff]
    %v611 = vld [vmem:[#allocation4 + $0xb0] sm:$0xff]
    %v612 = vld [vmem:[#allocation4 + $0xb8] sm:$0xff]
    %v613 = vld [vmem:[#allocation4 + $0xc0] sm:$0xff]
    %v614 = vld [vmem:[#allocation4 + $0xc8] sm:$0xff]
    %v615 = vld [vmem:[#allocation4 + $0xd0] sm:$0xff]
    %v616 = vld [vmem:[#allocation4 + $0xd8] sm:$0xff]
    %v617 = vld [vmem:[#allocation4 + $0xe0] sm:$0xff]
    %v618 = vld [vmem:[#allocation4 + $0xe8] sm:$0xff]
    %v619 = vld [vmem:[#allocation4 + $0xf0] sm:$0xff]
    %v620 = vld [vmem:[#allocation4 + $0xf8] sm:$0xff]
    %v621 = vld [vmem:[#allocation4 + $0x100] sm:$0xff]
    %v622 = vld [vmem:[#allocation4 + $0x108] sm:$0xff]
    %v623 = vld [vmem:[#allocation4 + $0x110] sm:$0xff]
    %v624 = vld [vmem:[#allocation4 + $0x118] sm:$0xff]
    %v625 = vld [vmem:[#allocation4 + $0x120] sm:$0xff]
    %v626 = vld [vmem:[#allocation4 + $0x128] sm:$0xff]
    %v627 = vld [vmem:[#allocation4 + $0x130] sm:$0xff]
    %v628 = vld [vmem:[#allocation4 + $0x138] sm:$0xff]
    %v629 = vld [vmem:[#allocation4 + $0x140] sm:$0xff]
    %v630 = vld [vmem:[#allocation4 + $0x148] sm:$0xff]
    %v631 = vld [vmem:[#allocation4 + $0x150] sm:$0xff]
    %v632 = vld [vmem:[#allocation4 + $0x158] sm:$0xff]
    %v633 = vld [vmem:[#allocation4 + $0x160] sm:$0xff]
    %v634 = vld [vmem:[#allocation4 + $0x168] sm:$0xff]
    %v635 = vld [vmem:[#allocation4 + $0x170] sm:$0xff]
    %v636 = vld [vmem:[#allocation4 + $0x178] sm:$0xff]
    %v637 = vld [vmem:[#allocation4 + $0x180] sm:$0xff]
    %v638 = vld [vmem:[#allocation4 + $0x188] sm:$0xff]
    %v639 = vld [vmem:[#allocation4 + $0x190] sm:$0xff]
    %v640 = vld [vmem:[#allocation4 + $0x198] sm:$0xff]
    %v641 = vld [vmem:[#allocation4 + $0x1a0] sm:$0xff]
    %v642 = vld [vmem:[#allocation4 + $0x1a8] sm:$0xff]
    %v643 = vld [vmem:[#allocation4 + $0x1b0] sm:$0xff]
    %v644 = vld [vmem:[#allocation4 + $0x1b8] sm:$0xff]
    %v645 = vld [vmem:[#allocation4 + $0x1c0] sm:$0xff]
    %v646 = vld [vmem:[#allocation4 + $0x1c8] sm:$0xff]
    %v647 = vld [vmem:[#allocation4 + $0x1d0] sm:$0xff]
    %v648 = vld [vmem:[#allocation4 + $0x1d8] sm:$0xff]
    %v649 = vld [vmem:[#allocation4 + $0x1e0] sm:$0xff]
    %v650 = vld [vmem:[#allocation4 + $0x1e8] sm:$0xff]
    %v651 = vld [vmem:[#allocation4 + $0x1f0] sm:$0xff]
    %v652 = vld [vmem:[#allocation4 + $0x1f8] sm:$0xff]
    %v653 = vld [vmem:[%s6] sm:$0x3]
    %v655 = vlaneseq
    %v656 = vshrl.u32 %v655, 7
    %v657 = vsub.s32 0, %v656
    %v658 = vrot.slane %v653, %v657
    %v659 = vlaneseq
    %v660 = vshrl.u32 %v659, 7
    %v661 = vsub.s32 1, %v660
    %v662 = vrot.slane %v653, %v661
    %665 = vmatprep.subr.mxu0 %v620
    %666 = vmatpush1.msra.mxu0 %v619
    %667 = vmatprep.subr.mxu0 %v618
    %668 = vmatpush1.msra.mxu0 %v617
    %669 = vmatprep.subr.mxu0 %v616
    %670 = vmatpush1.msra.mxu0 %v615
    %671 = vmatprep.subr.mxu0 %v614
    %672 = vmatpush1.msra.mxu0 %v613
    %673 = vmatprep.subr.mxu0 %v612
    %674 = vmatpush1.msra.mxu0 %v611
    %675 = vmatprep.subr.mxu0 %v610
    %676 = vmatpush1.msra.mxu0 %v609
    %677 = vmatprep.subr.mxu0 %v608
    %678 = vmatpush1.msra.mxu0 %v607
    %679 = vmatprep.subr.mxu0 %v606
    %680 = vmatpush1.msra.mxu0 %v605
    %681 = vmatprep.subr.mxu0 %v604
    %682 = vmatpush1.msra.mxu0 %v603
    %683 = vmatprep.subr.mxu0 %v602
    %684 = vmatpush1.msra.mxu0 %v601
    %685 = vmatprep.subr.mxu0 %v600
    %686 = vmatpush1.msra.mxu0 %v599
    %687 = vmatprep.subr.mxu0 %v598
    %688 = vmatpush1.msra.mxu0 %v597
    %689 = vmatprep.subr.mxu0 %v596
    %690 = vmatpush1.msra.mxu0 %v595
    %691 = vmatprep.subr.mxu0 %v594
    %692 = vmatpush1.msra.mxu0 %v593
    %693 = vmatprep.subr.mxu0 %v592
    %694 = vmatpush1.msra.mxu0 %v591
    %695 = vmatprep.subr.mxu0 %v590
    %696 = vmatpush1.msra.mxu0 %v589
    %697 = vmatprep.subr.mxu0 %v652
    %698 = vmatpush2.msra.mxu0 %v651
    %699 = vmatprep.subr.mxu0 %v650
    %700 = vmatpush2.msra.mxu0 %v649
    %701 = vmatprep.subr.mxu0 %v648
    %702 = vmatpush2.msra.mxu0 %v647
    %703 = vmatprep.subr.mxu0 %v646
    %704 = vmatpush2.msra.mxu0 %v645
    %705 = vmatprep.subr.mxu0 %v644
    %706 = vmatpush2.msra.mxu0 %v643
    %707 = vmatprep.subr.mxu0 %v642
    %708 = vmatpush2.msra.mxu0 %v641
    %709 = vmatprep.subr.mxu0 %v640
    %710 = vmatpush2.msra.mxu0 %v639
    %711 = vmatprep.subr.mxu0 %v638
    %712 = vmatpush2.msra.mxu0 %v637
    %713 = vmatprep.subr.mxu0 %v636
    %714 = vmatpush2.msra.mxu0 %v635
    %715 = vmatprep.subr.mxu0 %v634
    %716 = vmatpush2.msra.mxu0 %v633
    %717 = vmatprep.subr.mxu0 %v632
    %718 = vmatpush2.msra.mxu0 %v631
    %719 = vmatprep.subr.mxu0 %v630
    %720 = vmatpush2.msra.mxu0 %v629
    %721 = vmatprep.subr.mxu0 %v628
    %722 = vmatpush2.msra.mxu0 %v627
    %723 = vmatprep.subr.mxu0 %v626
    %724 = vmatpush2.msra.mxu0 %v625
    %725 = vmatprep.subr.mxu0 %v624
    %726 = vmatpush2.msra.mxu0 %v623
    %727 = vmatprep.subr.mxu0 %v622
    %728 = vmatpush2.msra.mxu0 %v621
    %729 = vmatprep.mubr.f32.mxu0 %v355
    %730 = vmatmul.mubr.f32.gmra.mxu0 %v354
    %v731 = vpop.f32.mrf.mxu0
    %v732 = vadd.f32 %v658, %v731
    %v733 = vpop.f32.mrf.mxu0
    %v734 = vadd.f32 %v662, %v733
    %735 = vmatprep.mubr.f32.mxu0 %v359
    %736 = vmatmul.mubr.f32.gmra.mxu0 %v358
    %v737 = vpop.f32.mrf.mxu0
    %v738 = vadd.f32 %v658, %v737
    %v739 = vpop.f32.mrf.mxu0
    %v740 = vadd.f32 %v662, %v739
    %741 = vmatprep.mubr.f32.mxu0 %v363
    %742 = vmatmul.mubr.f32.gmra.mxu0 %v362
    %v743 = vpop.f32.mrf.mxu0
    %v744 = vadd.f32 %v658, %v743
    %v745 = vpop.f32.mrf.mxu0
    %v746 = vadd.f32 %v662, %v745
    %747 = vmatprep.mubr.f32.mxu0 %v367
    %748 = vmatmul.mubr.f32.gmra.mxu0 %v366
    %v749 = vpop.f32.mrf.mxu0
    %v750 = vadd.f32 %v658, %v749
    %v751 = vpop.f32.mrf.mxu0
    %v752 = vadd.f32 %v662, %v751
    %753 = vmatprep.mubr.f32.mxu0 %v371
    %754 = vmatmul.mubr.f32.gmra.mxu0 %v370
    %v755 = vpop.f32.mrf.mxu0
    %v756 = vadd.f32 %v658, %v755
    %v757 = vpop.f32.mrf.mxu0
    %v758 = vadd.f32 %v662, %v757
    %759 = vmatprep.mubr.f32.mxu0 %v375
    %760 = vmatmul.mubr.f32.gmra.mxu0 %v374
    %v761 = vpop.f32.mrf.mxu0
    %v762 = vadd.f32 %v658, %v761
    %v763 = vpop.f32.mrf.mxu0
    %v764 = vadd.f32 %v662, %v763
    %765 = vmatprep.mubr.f32.mxu0 %v379
    %766 = vmatmul.mubr.f32.gmra.mxu0 %v378
    %v767 = vpop.f32.mrf.mxu0
    %v768 = vadd.f32 %v658, %v767
    %v769 = vpop.f32.mrf.mxu0
    %v770 = vadd.f32 %v662, %v769
    %771 = vmatprep.mubr.f32.mxu0 %v383
    %772 = vmatmul.mubr.f32.gmra.mxu0 %v382
    %v773 = vpop.f32.mrf.mxu0
    %v774 = vadd.f32 %v658, %v773
    %v775 = vpop.f32.mrf.mxu0
    %v776 = vadd.f32 %v662, %v775
    %777 = vdwg.mxu0
    %v778 = vmax.f32 %v732, 0.0
    %v779 = vmax.f32 %v734, 0.0
    %v780 = vmax.f32 %v738, 0.0
    %v781 = vmax.f32 %v740, 0.0
    %v782 = vmax.f32 %v744, 0.0
    %v783 = vmax.f32 %v746, 0.0
    %v784 = vmax.f32 %v750, 0.0
    %v785 = vmax.f32 %v752, 0.0
    %v786 = vmax.f32 %v756, 0.0
    %v787 = vmax.f32 %v758, 0.0
    %v788 = vmax.f32 %v762, 0.0
    %v789 = vmax.f32 %v764, 0.0
    %v790 = vmax.f32 %v768, 0.0
    %v791 = vmax.f32 %v770, 0.0
    %v792 = vmax.f32 %v774, 0.0
    %v793 = vmax.f32 %v776, 0.0
    %v794 = vld [vmem:[%s7] sm:$0x3]
    %v795 = vld [vmem:[%s8] sm:$0x3]
    %v797 = vlaneseq
    %v798 = vshrl.u32 %v797, 7
    %v799 = vsub.s32 0, %v798
    %v800 = vrot.slane %v794, %v799
    %v801 = vlaneseq
    %v802 = vshrl.u32 %v801, 7
    %v803 = vsub.s32 1, %v802
    %v804 = vrot.slane %v794, %v803
    %v807 = vmul.f32 %v573, %v800
    %v808 = vmul.f32 %v574, %v804
    %v809 = vmul.f32 %v575, %v800
    %v810 = vmul.f32 %v576, %v804
    %v811 = vmul.f32 %v577, %v800
    %v812 = vmul.f32 %v578, %v804
    %v813 = vmul.f32 %v579, %v800
    %v814 = vmul.f32 %v580, %v804
    %v815 = vmul.f32 %v581, %v800
    %v816 = vmul.f32 %v582, %v804
    %v817 = vmul.f32 %v583, %v800
    %v818 = vmul.f32 %v584, %v804
    %v819 = vmul.f32 %v585, %v800
    %v820 = vmul.f32 %v586, %v804
    %v821 = vmul.f32 %v587, %v800
    %v822 = vmul.f32 %v588, %v804
    %v823 = vadd.f32 %v807, %v808
    %824 = vadd.xlane.f32.xlu0 %v823
    %v825 = vpop.xlane.xlu0 %824
    %v826 = vadd.f32 %v809, %v810
    %827 = vadd.xlane.f32.xlu0 %v826
    %v828 = vpop.xlane.xlu0 %827
    %v829 = vadd.f32 %v811, %v812
    %830 = vadd.xlane.f32.xlu0 %v829
    %v831 = vpop.xlane.xlu0 %830
    %v832 = vadd.f32 %v813, %v814
    %833 = vadd.xlane.f32.xlu0 %v832
    %v834 = vpop.xlane.xlu0 %833
    %v835 = vadd.f32 %v815, %v816
    %836 = vadd.xlane.f32.xlu0 %v835
    %v837 = vpop.xlane.xlu0 %836
    %v838 = vadd.f32 %v817, %v818
    %839 = vadd.xlane.f32.xlu0 %v838
    %v840 = vpop.xlane.xlu0 %839
    %v841 = vadd.f32 %v819, %v820
    %842 = vadd.xlane.f32.xlu0 %v841
    %v843 = vpop.xlane.xlu0 %842
    %v844 = vadd.f32 %v821, %v822
    %845 = vadd.xlane.f32.xlu0 %v844
    %v846 = vpop.xlane.xlu0 %845
    %v848 = vlaneseq
    %v849 = vshrl.u32 %v848, 7
    %v850 = vsub.s32 0, %v849
    %v851 = vrot.slane %v795, %v850
    %v852 = vlaneseq
    %v853 = vshrl.u32 %v852, 7
    %v854 = vsub.s32 1, %v853
    %v855 = vrot.slane %v795, %v854
    %v858 = vmul.f32 %v778, %v851
    %v859 = vmul.f32 %v779, %v855
    %v860 = vmul.f32 %v780, %v851
    %v861 = vmul.f32 %v781, %v855
    %v862 = vmul.f32 %v782, %v851
    %v863 = vmul.f32 %v783, %v855
    %v864 = vmul.f32 %v784, %v851
    %v865 = vmul.f32 %v785, %v855
    %v866 = vmul.f32 %v786, %v851
    %v867 = vmul.f32 %v787, %v855
    %v868 = vmul.f32 %v788, %v851
    %v869 = vmul.f32 %v789, %v855
    %v870 = vmul.f32 %v790, %v851
    %v871 = vmul.f32 %v791, %v855
    %v872 = vmul.f32 %v792, %v851
    %v873 = vmul.f32 %v793, %v855
    %v874 = vadd.f32 %v858, %v859
    %875 = vadd.xlane.f32.xlu0 %v874
    %v876 = vpop.xlane.xlu0 %875
    %v877 = vadd.f32 %v860, %v861
    %878 = vadd.xlane.f32.xlu0 %v877
    %v879 = vpop.xlane.xlu0 %878
    %v880 = vadd.f32 %v862, %v863
    %881 = vadd.xlane.f32.xlu0 %v880
    %v882 = vpop.xlane.xlu0 %881
    %v883 = vadd.f32 %v864, %v865
    %884 = vadd.xlane.f32.xlu0 %v883
    %v885 = vpop.xlane.xlu0 %884
    %v886 = vadd.f32 %v866, %v867
    %887 = vadd.xlane.f32.xlu0 %v886
    %v888 = vpop.xlane.xlu0 %887
    %v889 = vadd.f32 %v868, %v869
    %890 = vadd.xlane.f32.xlu0 %v889
    %v891 = vpop.xlane.xlu0 %890
    %v892 = vadd.f32 %v870, %v871
    %893 = vadd.xlane.f32.xlu0 %v892
    %v894 = vpop.xlane.xlu0 %893
    %v895 = vadd.f32 %v872, %v873
    %896 = vadd.xlane.f32.xlu0 %v895
    %v897 = vpop.xlane.xlu0 %896
    %v898 = vlaneseq
    %v899 = vand.u32 %v898, 127
    %vm900 = vcmp.eq.s32.totalorder %v899, 0
    %v901 = vsel %vm900, %v825, %v876
    %v902 = vsel %vm900, %v828, %v879
    %v903 = vsel %vm900, %v831, %v882
    %v904 = vsel %vm900, %v834, %v885
    %v905 = vsel %vm900, %v837, %v888
    %v906 = vsel %vm900, %v840, %v891
    %v907 = vsel %vm900, %v843, %v894
    %v908 = vsel %vm900, %v846, %v897
    %v909 = vld [vmem:[%s9] sm:$0x1]
    %v911 = vlaneseq
    %v912 = vshrl.u32 %v911, 7
    %v913 = vsub.s32 0, %v912
    %v914 = vrot.slane %v909, %v913
    %v916 = vadd.f32 %v901, %v914
    %v917 = vadd.f32 %v902, %v914
    %v918 = vadd.f32 %v903, %v914
    %v919 = vadd.f32 %v904, %v914
    %v920 = vadd.f32 %v905, %v914
    %v921 = vadd.f32 %v906, %v914
    %v922 = vadd.f32 %v907, %v914
    %v923 = vadd.f32 %v908, %v914
    %vm924 = vcmask 15360
    %925 = vst.msk [vmem:[%s10] sm:$0xff] %vm924, %v916
    %926 = vst.msk [vmem:[%s10 + $0x8] sm:$0xff] %vm924, %v917
    %927 = vst.msk [vmem:[%s10 + $0x10] sm:$0xff] %vm924, %v918
    %928 = vst.msk [vmem:[%s10 + $0x18] sm:$0xff] %vm924, %v919
    %929 = vst.msk [vmem:[%s10 + $0x20] sm:$0xff] %vm924, %v920
    %930 = vst.msk [vmem:[%s10 + $0x28] sm:$0xff] %vm924, %v921
    %931 = vst.msk [vmem:[%s10 + $0x30] sm:$0xff] %vm924, %v922
    %932 = vst.msk [vmem:[%s10 + $0x38] sm:$0xff] %vm924, %v923
    // Predicated region
    $region50: #{tpu_custom_call.1} parent=1 // pred_check
      _
    $region51: #{tpu_custom_call.1} parent=1 // pred_check_branch
      %934 = sbr.rel (0) target = $region53
    $region52: #{tpu_custom_call.1} parent=1 // pred_region
      _
    $region53: #{tpu_custom_call.1} parent=1 // pred_fallthru
      _
    // Predicated region
    $region54: #{tpu_custom_call.1} parent=1 // pred_check
      _
    $region55: #{tpu_custom_call.1} parent=1 // pred_check_branch
      %936 = sbr.rel (0) target = $region57
    $region56: #{tpu_custom_call.1} parent=1 // pred_region
      _
    $region57: #{tpu_custom_call.1} parent=1 // pred_fallthru
      _
    %937 = vsyncpa [#allocation3], 1
    %938 = vsyncpa [#allocation5], 1

</llo_original>
